<compile_context>
chip_gen: v6e
topology: v6e:2x2x1
jax: 0.10.0
libtpu: 0.0.40
codegen_flags: <defaults>
</compile_context>

<pallas_src>
import jax
import jax.numpy as jnp
from jax import lax
from jax.experimental import pallas as pl
from jax.experimental.pallas import tpu as pltpu


def _round_up(x, m):
    return ((x + m - 1) // m) * m


def _im2col_3x3(x, out_h, out_w):
    """Build a 3x3 "valid" im2col patch matrix.

    x:       (out_h + 2, out_w + 2, C)   value (already includes the 1-px halo)
    returns: (out_h * out_w, 9 * C)      K-axis ordering is (dy, dx, c), dy major,
                                         matching an HWIO weight reshaped to (9*C, Cout).
    """
    c = x.shape[-1]
    # dx-shift concat once per tile (2 sublane-unaligned copies total).
    xc = jnp.concatenate([x[:, dx:dx + out_w, :] for dx in range(3)], axis=-1)
    # dy shifts are slices along dim 0 (outside the (8,128) tile) -> cheap.
    p = jnp.concatenate([xc[dy:dy + out_h] for dy in range(3)], axis=-1)
    return p.reshape(out_h * out_w, 9 * c)


def fused_double_conv_kernel(x_hbm, w1_ref, b1_ref, w2_ref, b2_ref, o_ref,
                             x_vmem, y1_vmem, dma_sem):
    """Fused (conv3x3 -> BN -> ReLU) x 2 for one (batch, H-tile) grid step.

    x_hbm:   (N*(H+4), W+2, Cin_p)        2-row / 1-col zero-padded input, HBM (pl.ANY)
    w1_ref:  (9*Cin_p, C1_p)              layer-1 weights, BN scale folded in
    b1_ref:  (1, C1_p)                    layer-1 folded bias (conv bias + BN)
    w2_ref:  (9*C1_p, C2_p)               layer-2 weights, BN scale folded in
    b2_ref:  (1, C2_p)                    layer-2 folded bias
    o_ref:   (1, tile_h, W, C2_p)         output tile (lane-dense channels)
    x_vmem:  (tile_h+4, W+2, Cin_p)       VMEM scratch for the halo input slab
    y1_vmem: (tile_h+2, W+2, C1_p)        VMEM scratch for the layer-1 activation slab
    dma_sem: DMA semaphore
    """
    th = o_ref.shape[1]                 # output rows per tile
    w_img = o_ref.shape[2]              # full image width
    c2p = o_ref.shape[3]
    c1p = y1_vmem.shape[2]

    n = pl.program_id(0)
    t = pl.program_id(1)
    h_img = pl.num_programs(1) * th     # full image height (tile_h divides H)

    # ---- manual halo DMA: (tile_h+4, W+2, Cin_p) slab (2-row halo for 3x3 o 3x3) ----
    start = n * (h_img + 4) + t * th
    cp = pltpu.make_async_copy(x_hbm.at[pl.ds(start, th + 4)], x_vmem, dma_sem)
    cp.start()
    cp.wait()

    # ---- layer 1: one fat matmul  M=(tile_h+2)*W, K=9*Cin_p, N=C1_p ----------------
    p1 = _im2col_3x3(x_vmem[...], th + 2, w_img)
    acc1 = jnp.dot(p1, w1_ref[...], preferred_element_type=jnp.float32)
    y1 = jnp.maximum(acc1 + b1_ref[...], 0.0)                 # folded bias + ReLU
    y1 = y1.reshape(th + 2, w_img, c1p)

    # Halo rows that fall outside the real image are exactly conv2's zero padding.
    i_idx = lax.broadcasted_iota(jnp.int32, (th + 2, w_img, c1p), 0)
    r_glob = i_idx + (t * th - 1)
    row_ok = (r_glob >= 0) & (r_glob < h_img)
    y1 = jnp.where(row_ok, y1, 0.0)

    # Store the intermediate in VMEM (never goes to HBM).  Border columns of the
    # slab are conv2's W-padding -> keep them zero; interior gets the computed rows.
    zero_col = jnp.zeros((th + 2, 1, c1p), y1_vmem.dtype)
    y1_vmem[:, 0:1, :] = zero_col
    y1_vmem[:, w_img + 1:w_img + 2, :] = zero_col
    y1_vmem[:, 1:w_img + 1, :] = y1.astype(y1_vmem.dtype)

    # ---- layer 2: second fat matmul, consuming the VMEM-resident intermediate ------
    p2 = _im2col_3x3(y1_vmem[...], th, w_img)
    acc2 = jnp.dot(p2, w2_ref[...], preferred_element_type=jnp.float32)
    y2 = jnp.maximum(acc2 + b2_ref[...], 0.0)
    o_ref[...] = y2.reshape(1, th, w_img, c2p).astype(o_ref.dtype)


def _fold_bn_into_weights(p, cin_pad, cout_pad, compute_dtype, eps=1e-5):
    """OIHW conv weight + eval-mode BN -> lane-padded (9*cin_pad, cout_pad) weight
    (BN scale folded in) and (1, cout_pad) folded bias."""
    w = jnp.transpose(p["w"], (2, 3, 1, 0))                      # OIHW -> HWIO
    inv_std = lax.rsqrt(p["running_var"].astype(jnp.float32) + eps)
    scale = p["gamma"] * inv_std                                 # (Cout,)
    bias = (p["b"] - p["running_mean"]) * scale + p["beta"]      # (Cout,)
    w = w * scale[None, None, None, :]                           # fold BN scale
    kh, kw, cin, cout = w.shape
    w = jnp.pad(w, ((0, 0), (0, 0), (0, cin_pad - cin), (0, cout_pad - cout)))
    w = w.reshape(kh * kw * cin_pad, cout_pad).astype(compute_dtype)
    b = jnp.pad(bias, (0, cout_pad - cout)).reshape(1, cout_pad).astype(jnp.float32)
    return w, b


def double_conv_forward(x_nchw, params, *, tile_h=None, compute_dtype=jnp.float32):
    """Equivalent of double_conv.forward (eval-mode BN). Input/output are NCHW."""
    batch, in_ch, height, width = x_nchw.shape
    out_ch = params["l1"]["w"].shape[0]

    cin_p = _round_up(in_ch, 128)
    cmid_p = _round_up(out_ch, 128)
    cout_p = _round_up(out_ch, 128)

    if tile_h is None:
        tile_h = 8 if height % 8 == 0 else height
    assert height % tile_h == 0, "tile_h must divide H"

    # Glue: NCHW -> NHWC, zero pad (2 rows / 1 col: fused 3x3 o 3x3 halo), lane-pad
    # channels to a multiple of 128, and flatten (N, H+4) so the in-kernel halo DMA
    # is a single dynamic row-slice.
    x = jnp.transpose(x_nchw, (0, 2, 3, 1))
    x = jnp.pad(x, ((0, 0), (2, 2), (1, 1), (0, cin_p - in_ch))).astype(compute_dtype)
    x = x.reshape(batch * (height + 4), width + 2, cin_p)

    w1, b1 = _fold_bn_into_weights(params["l1"], cin_p, cmid_p, compute_dtype)
    w2, b2 = _fold_bn_into_weights(params["l2"], cmid_p, cout_p, compute_dtype)

    out = pl.pallas_call(
        fused_double_conv_kernel,
        out_shape=jax.ShapeDtypeStruct((batch, height, width, cout_p), x_nchw.dtype),
        grid_spec=pltpu.PrefetchScalarGridSpec(
            num_scalar_prefetch=0,
            grid=(batch, height // tile_h),
            in_specs=[
                pl.BlockSpec(memory_space=pl.ANY),                       # padded input (HBM)
                pl.BlockSpec((9 * cin_p, cmid_p), lambda n, t: (0, 0)),  # w1
                pl.BlockSpec((1, cmid_p), lambda n, t: (0, 0)),          # b1
                pl.BlockSpec((9 * cmid_p, cout_p), lambda n, t: (0, 0)), # w2
                pl.BlockSpec((1, cout_p), lambda n, t: (0, 0)),          # b2
            ],
            out_specs=pl.BlockSpec((1, tile_h, width, cout_p),
                                   lambda n, t: (n, t, 0, 0)),
            scratch_shapes=[
                pltpu.VMEM((tile_h + 4, width + 2, cin_p), compute_dtype),   # input slab
                pltpu.VMEM((tile_h + 2, width + 2, cmid_p), compute_dtype),  # layer-1 act
                pltpu.SemaphoreType.DMA,
            ],
        ),
        compiler_params=pltpu.CompilerParams(
            dimension_semantics=("parallel", "parallel"),
            vmem_limit_bytes=32 * 1024 * 1024,
        ),
    )(x, w1, b1, w2, b2)

    out = out[:, :, :, :out_ch]               # drop channel lane-padding
    return jnp.transpose(out, (0, 3, 1, 2))   # NHWC -> NCHW


def init_params(key, in_ch, out_ch):
    """Deterministic synthetic parameters matching nn.Conv2d/BatchNorm2d shapes."""
    def one_layer(k, cin, cout):
        k1, k2, k3, k4, k5, k6 = jax.random.split(k, 6)
        return {
            "w": 0.1 * jax.random.normal(k1, (cout, cin, 3, 3), jnp.float32),  # OIHW
            "b": 0.1 * jax.random.normal(k2, (cout,), jnp.float32),
            "gamma": 1.0 + 0.1 * jax.random.normal(k3, (cout,), jnp.float32),
            "beta": 0.1 * jax.random.normal(k4, (cout,), jnp.float32),
            "running_mean": 0.1 * jax.random.normal(k5, (cout,), jnp.float32),
            "running_var": jnp.abs(1.0 + 0.1 * jax.random.normal(k6, (cout,), jnp.float32)),
        }

    ka, kb = jax.random.split(key)
    return {"l1": one_layer(ka, in_ch, out_ch),
            "l2": one_layer(kb, out_ch, out_ch)}


def _reference_forward(x_nchw, params, eps=1e-5):
    """Pure-JAX (XLA) reference mirroring the PyTorch module (eval-mode BN)."""
    x = x_nchw
    for layer in ("l1", "l2"):
        p = params[layer]
        x = lax.conv_general_dilated(
            x, p["w"], window_strides=(1, 1), padding=((1, 1), (1, 1)),
            dimension_numbers=("NCHW", "OIHW", "NCHW"))
        x = x + p["b"][None, :, None, None]
        x = (x - p["running_mean"][None, :, None, None]) / jnp.sqrt(
            p["running_var"][None, :, None, None] + eps)
        x = x * p["gamma"][None, :, None, None] + p["beta"][None, :, None, None]
        x = jnp.maximum(x, 0.0)
    return x


if __name__ == "__main__":
    key = jax.random.PRNGKey(0)
    k_x, k_p = jax.random.split(key)

    N, IN_CH, OUT_CH, H, W = 2, 4, 8, 16, 16
    x = jax.random.normal(k_x, (N, IN_CH, H, W), jnp.float32)
    params = init_params(k_p, IN_CH, OUT_CH)

    out = jax.jit(double_conv_forward)(x, params)
    out = jax.block_until_ready(out)

    ref = _reference_forward(x, params)
    assert out.shape == (N, OUT_CH, H, W)
    assert jnp.allclose(out, ref, atol=1e-4, rtol=1e-4), "mismatch vs reference"

    print("KERNEL_OK")
</pallas_src>

<mosaic_0001>
module attributes {stable_mosaic.version = 11 : i64} {
  func.func @fused_double_conv_kernel(%arg0: i32, %arg1: i32, %arg2: memref<40x18x128xf32, #tpu.memory_space<any>>, %arg3: memref<1152x128xf32, #tpu.memory_space<vmem>>, %arg4: memref<1x128xf32, #tpu.memory_space<vmem>>, %arg5: memref<1152x128xf32, #tpu.memory_space<vmem>>, %arg6: memref<1x128xf32, #tpu.memory_space<vmem>>, %arg7: memref<1x8x16x128xf32, #tpu.memory_space<vmem>>, %arg8: memref<12x18x128xf32, #tpu.memory_space<vmem>>, %arg9: memref<10x18x128xf32, #tpu.memory_space<vmem>>, %arg10: memref<!tpu.dma_semaphore, #tpu.memory_space<semaphore_mem>>) attributes {dimension_semantics = [#tpu.dimension_semantics<parallel>, #tpu.dimension_semantics<parallel>], iteration_bounds = array<i64: 2, 2>, scalar_prefetch = 0 : i64, scratch_operands = 3 : i64, tpu.core_type = #tpu.core_type<tc>, window_params = [{}, {pipeline_mode = #tpu.pipeline_mode<synchronous>, transform_indices = @transform_1, window_bounds = array<i64: 1152, 128>}, {pipeline_mode = #tpu.pipeline_mode<synchronous>, transform_indices = @transform_2, window_bounds = array<i64: 1, 128>}, {pipeline_mode = #tpu.pipeline_mode<synchronous>, transform_indices = @transform_3, window_bounds = array<i64: 1152, 128>}, {pipeline_mode = #tpu.pipeline_mode<synchronous>, transform_indices = @transform_4, window_bounds = array<i64: 1, 128>}, {transform_indices = @transform_5, window_bounds = array<i64: 1, 8, 16, 128>}]} {
    %c20_i32 = arith.constant 20 : i32
    %0 = arith.muli %arg0, %c20_i32 : i32
    %c8_i32 = arith.constant 8 : i32
    %1 = arith.muli %arg1, %c8_i32 : i32
    %2 = arith.addi %0, %1 : i32
    %c0_i32 = arith.constant 0 : i32
    %c0_i32_0 = arith.constant 0 : i32
    %3 = tpu.memref_slice %arg2[%2, %c0_i32, %c0_i32_0] : memref<40x18x128xf32, #tpu.memory_space<any>> -> memref<12x18x128xf32, #tpu.memory_space<any>>
    tpu.enqueue_dma source(%3 : memref<12x18x128xf32, #tpu.memory_space<any>>) target(%arg8 : memref<12x18x128xf32, #tpu.memory_space<vmem>>) target_semaphore(%arg10 : memref<!tpu.dma_semaphore, #tpu.memory_space<semaphore_mem>>)
    %c0_i32_1 = arith.constant 0 : i32
    %c0_i32_2 = arith.constant 0 : i32
    %4 = tpu.memref_slice %arg2[%2, %c0_i32_1, %c0_i32_2] : memref<40x18x128xf32, #tpu.memory_space<any>> -> memref<12x18x128xf32, #tpu.memory_space<any>>
    tpu.wait_dma2 semaphore(%arg10 : memref<!tpu.dma_semaphore, #tpu.memory_space<semaphore_mem>>) src(%4 : memref<12x18x128xf32, #tpu.memory_space<any>>) dst(%arg8 : memref<12x18x128xf32, #tpu.memory_space<vmem>>)
    %c0 = arith.constant 0 : index
    %c0_3 = arith.constant 0 : index
    %c0_4 = arith.constant 0 : index
    %5 = vector.load %arg8[%c0, %c0_3, %c0_4] : memref<12x18x128xf32, #tpu.memory_space<vmem>>, vector<12x18x128xf32>
    %6 = vector.extract_strided_slice %5 {offsets = [0, 0, 0], sizes = [12, 16, 128], strides = [1, 1, 1]} : vector<12x18x128xf32> to vector<12x16x128xf32>
    %7 = vector.extract_strided_slice %5 {offsets = [0, 1, 0], sizes = [12, 16, 128], strides = [1, 1, 1]} : vector<12x18x128xf32> to vector<12x16x128xf32>
    %8 = vector.extract_strided_slice %5 {offsets = [0, 2, 0], sizes = [12, 16, 128], strides = [1, 1, 1]} : vector<12x18x128xf32> to vector<12x16x128xf32>
    %9 = tpu.concatenate %6, %7, %8 in 2 : vector<12x16x128xf32>, vector<12x16x128xf32>, vector<12x16x128xf32> -> vector<12x16x384xf32>
    %10 = vector.extract_strided_slice %9 {offsets = [0, 0, 0], sizes = [10, 16, 384], strides = [1, 1, 1]} : vector<12x16x384xf32> to vector<10x16x384xf32>
    %11 = vector.extract_strided_slice %9 {offsets = [1, 0, 0], sizes = [10, 16, 384], strides = [1, 1, 1]} : vector<12x16x384xf32> to vector<10x16x384xf32>
    %12 = vector.extract_strided_slice %9 {offsets = [2, 0, 0], sizes = [10, 16, 384], strides = [1, 1, 1]} : vector<12x16x384xf32> to vector<10x16x384xf32>
    %13 = tpu.concatenate %10, %11, %12 in 2 : vector<10x16x384xf32>, vector<10x16x384xf32>, vector<10x16x384xf32> -> vector<10x16x1152xf32>
    %14 = vector.shape_cast %13 : vector<10x16x1152xf32> to vector<160x1152xf32>
    %c0_5 = arith.constant 0 : index
    %c0_6 = arith.constant 0 : index
    %15 = vector.load %arg3[%c0_5, %c0_6] : memref<1152x128xf32, #tpu.memory_space<vmem>>, vector<1152x128xf32>
    %cst = arith.constant dense<0.000000e+00> : vector<160x128xf32>
    %16 = tpu.matmul %14, %15, %cst {dimension_numbers = #tpu.dot_dimension_numbers<[1], [0], [0], [1], [0, 0, 1, 1], [], []>} : vector<160x1152xf32>, vector<1152x128xf32>, vector<160x128xf32> -> vector<160x128xf32>
    %c0_7 = arith.constant 0 : index
    %c0_8 = arith.constant 0 : index
    %17 = vector.load %arg4[%c0_7, %c0_8] : memref<1x128xf32, #tpu.memory_space<vmem>>, vector<1x128xf32>
    %18 = vector.broadcast %17 : vector<1x128xf32> to vector<160x128xf32>
    %19 = arith.addf %16, %18 : vector<160x128xf32>
    %cst_9 = arith.constant 0.000000e+00 : f32
    %20 = vector.broadcast %cst_9 : f32 to vector<160x128xf32>
    %21 = arith.maximumf %19, %20 : vector<160x128xf32>
    %22 = vector.shape_cast %21 : vector<160x128xf32> to vector<10x16x128xf32>
    %23 = tpu.iota {dimensions = array<i32: 0>} : vector<10x16x128xi32>
    %c8_i32_10 = arith.constant 8 : i32
    %24 = arith.muli %arg1, %c8_i32_10 : i32
    %c1_i32 = arith.constant 1 : i32
    %25 = arith.subi %24, %c1_i32 : i32
    %26 = vector.broadcast %25 : i32 to vector<10x16x128xi32>
    %27 = arith.addi %23, %26 : vector<10x16x128xi32>
    %c0_i32_11 = arith.constant 0 : i32
    %28 = vector.broadcast %c0_i32_11 : i32 to vector<10x16x128xi32>
    %29 = arith.cmpi sge, %27, %28 : vector<10x16x128xi32>
    %c16_i32 = arith.constant 16 : i32
    %30 = vector.broadcast %c16_i32 : i32 to vector<10x16x128xi32>
    %31 = arith.cmpi slt, %27, %30 : vector<10x16x128xi32>
    %32 = arith.andi %29, %31 : vector<10x16x128xi1>
    %cst_12 = arith.constant 0.000000e+00 : f32
    %33 = vector.broadcast %cst_12 : f32 to vector<10x16x128xf32>
    %34 = arith.select %32, %22, %33 : vector<10x16x128xi1>, vector<10x16x128xf32>
    %cst_13 = arith.constant 0.000000e+00 : f32
    %35 = vector.broadcast %cst_13 : f32 to vector<10x1x128xf32>
    %c0_14 = arith.constant 0 : index
    %c0_15 = arith.constant 0 : index
    %c0_16 = arith.constant 0 : index
    %36 = vector.load %arg9[%c0_14, %c0_15, %c0_16] : memref<10x18x128xf32, #tpu.memory_space<vmem>>, vector<10x1x128xf32>
    tpu.vector_store %arg9[%c0_14, %c0_15, %c0_16], %35 {strides = array<i32>} : memref<10x18x128xf32, #tpu.memory_space<vmem>>, vector<10x1x128xf32>,
    %c0_17 = arith.constant 0 : index
    %c17 = arith.constant 17 : index
    %c0_18 = arith.constant 0 : index
    %37 = vector.load %arg9[%c0_17, %c17, %c0_18] : memref<10x18x128xf32, #tpu.memory_space<vmem>>, vector<10x1x128xf32>
    tpu.vector_store %arg9[%c0_17, %c17, %c0_18], %35 {strides = array<i32>} : memref<10x18x128xf32, #tpu.memory_space<vmem>>, vector<10x1x128xf32>,
    %c0_19 = arith.constant 0 : index
    %c1 = arith.constant 1 : index
    %c0_20 = arith.constant 0 : index
    %38 = vector.load %arg9[%c0_19, %c1, %c0_20] : memref<10x18x128xf32, #tpu.memory_space<vmem>>, vector<10x16x128xf32>
    tpu.vector_store %arg9[%c0_19, %c1, %c0_20], %34 {strides = array<i32>} : memref<10x18x128xf32, #tpu.memory_space<vmem>>, vector<10x16x128xf32>,
    %c0_21 = arith.constant 0 : index
    %c0_22 = arith.constant 0 : index
    %c0_23 = arith.constant 0 : index
    %39 = vector.load %arg9[%c0_21, %c0_22, %c0_23] : memref<10x18x128xf32, #tpu.memory_space<vmem>>, vector<10x18x128xf32>
    %40 = vector.extract_strided_slice %39 {offsets = [0, 0, 0], sizes = [10, 16, 128], strides = [1, 1, 1]} : vector<10x18x128xf32> to vector<10x16x128xf32>
    %41 = vector.extract_strided_slice %39 {offsets = [0, 1, 0], sizes = [10, 16, 128], strides = [1, 1, 1]} : vector<10x18x128xf32> to vector<10x16x128xf32>
    %42 = vector.extract_strided_slice %39 {offsets = [0, 2, 0], sizes = [10, 16, 128], strides = [1, 1, 1]} : vector<10x18x128xf32> to vector<10x16x128xf32>
    %43 = tpu.concatenate %40, %41, %42 in 2 : vector<10x16x128xf32>, vector<10x16x128xf32>, vector<10x16x128xf32> -> vector<10x16x384xf32>
    %44 = vector.extract_strided_slice %43 {offsets = [0, 0, 0], sizes = [8, 16, 384], strides = [1, 1, 1]} : vector<10x16x384xf32> to vector<8x16x384xf32>
    %45 = vector.extract_strided_slice %43 {offsets = [1, 0, 0], sizes = [8, 16, 384], strides = [1, 1, 1]} : vector<10x16x384xf32> to vector<8x16x384xf32>
    %46 = vector.extract_strided_slice %43 {offsets = [2, 0, 0], sizes = [8, 16, 384], strides = [1, 1, 1]} : vector<10x16x384xf32> to vector<8x16x384xf32>
    %47 = tpu.concatenate %44, %45, %46 in 2 : vector<8x16x384xf32>, vector<8x16x384xf32>, vector<8x16x384xf32> -> vector<8x16x1152xf32>
    %48 = vector.shape_cast %47 : vector<8x16x1152xf32> to vector<128x1152xf32>
    %c0_24 = arith.constant 0 : index
    %c0_25 = arith.constant 0 : index
    %49 = vector.load %arg5[%c0_24, %c0_25] : memref<1152x128xf32, #tpu.memory_space<vmem>>, vector<1152x128xf32>
    %cst_26 = arith.constant dense<0.000000e+00> : vector<128x128xf32>
    %50 = tpu.matmul %48, %49, %cst_26 {dimension_numbers = #tpu.dot_dimension_numbers<[1], [0], [0], [1], [0, 0, 1, 1], [], []>} : vector<128x1152xf32>, vector<1152x128xf32>, vector<128x128xf32> -> vector<128x128xf32>
    %c0_27 = arith.constant 0 : index
    %c0_28 = arith.constant 0 : index
    %51 = vector.load %arg6[%c0_27, %c0_28] : memref<1x128xf32, #tpu.memory_space<vmem>>, vector<1x128xf32>
    %52 = vector.broadcast %51 : vector<1x128xf32> to vector<128x128xf32>
    %53 = arith.addf %50, %52 : vector<128x128xf32>
    %cst_29 = arith.constant 0.000000e+00 : f32
    %54 = vector.broadcast %cst_29 : f32 to vector<128x128xf32>
    %55 = arith.maximumf %53, %54 : vector<128x128xf32>
    %56 = vector.shape_cast %55 : vector<128x128xf32> to vector<1x8x16x128xf32>
    %c0_30 = arith.constant 0 : index
    %c0_31 = arith.constant 0 : index
    %c0_32 = arith.constant 0 : index
    %c0_33 = arith.constant 0 : index
    %57 = vector.load %arg7[%c0_30, %c0_31, %c0_32, %c0_33] : memref<1x8x16x128xf32, #tpu.memory_space<vmem>>, vector<1x8x16x128xf32>
    tpu.vector_store %arg7[%c0_30, %c0_31, %c0_32, %c0_33], %56 {strides = array<i32>} : memref<1x8x16x128xf32, #tpu.memory_space<vmem>>, vector<1x8x16x128xf32>,
    return
  }
  func.func @transform_1(%arg0: i32, %arg1: i32) -> (i32, i32) {
    %c0_i32 = arith.constant 0 : i32
    %c0_i32_0 = arith.constant 0 : i32
    %c0_i32_1 = arith.constant 0 : i32
    return %c0_i32, %c0_i32_0 : i32, i32
  }
  func.func @transform_2(%arg0: i32, %arg1: i32) -> (i32, i32) {
    %c0_i32 = arith.constant 0 : i32
    %c0_i32_0 = arith.constant 0 : i32
    %c0_i32_1 = arith.constant 0 : i32
    return %c0_i32, %c0_i32_0 : i32, i32
  }
  func.func @transform_3(%arg0: i32, %arg1: i32) -> (i32, i32) {
    %c0_i32 = arith.constant 0 : i32
    %c0_i32_0 = arith.constant 0 : i32
    %c0_i32_1 = arith.constant 0 : i32
    return %c0_i32, %c0_i32_0 : i32, i32
  }
  func.func @transform_4(%arg0: i32, %arg1: i32) -> (i32, i32) {
    %c0_i32 = arith.constant 0 : i32
    %c0_i32_0 = arith.constant 0 : i32
    %c0_i32_1 = arith.constant 0 : i32
    return %c0_i32, %c0_i32_0 : i32, i32
  }
  func.func @transform_5(%arg0: i32, %arg1: i32) -> (i32, i32, i32, i32) {
    %c0_i32 = arith.constant 0 : i32
    %c0_i32_0 = arith.constant 0 : i32
    %c0_i32_1 = arith.constant 0 : i32
    return %arg0, %arg1, %c0_i32, %c0_i32_0 : i32, i32, i32, i32
  }
}

</mosaic_0001>

<llo_original>
// kernel: double_conv_forward.1
$region0: #{double_conv_forward.1}
  #allocation0 [shape = 'u32[]', space=smem, size = 0x4, offset = 0x4, fixed_abs, tag = 'smem constant byte address 0x4 - core index']
  #allocation1 [shape = 'u32[144,128]{1,0:T(1,128)}', space=vmem, size = 0x12000, scoped, tag = 'internal scratch']
  #allocation2 [shape = 'f32[12,18,128]{2,1,0:T(8,128)}', space=vmem, size = 0x24000, scoped, tag = 'scratch operand']
  #allocation3 [shape = 'f32[10,18,128]{2,1,0:T(8,128)}', space=vmem, size = 0x1e000, scoped, tag = 'scratch operand']
  #allocation4 [shape = 's32[1]{0}', space=sflag, size = 0x4, scoped, tag = 'scratch operand']
  #allocation5 [shape = 's32[]', space=sflag, size = 0x4, offset = 0, fixed_abs, tag = 'sflag constant byte address 0x0 - dummy sync flag']
  %s0 = inlined_call_operand.vmem [shape: f32[40,18,128], index: 0, kind: input, shape index: {}]
  %s1 = inlined_call_operand.vmem [shape: f32[1152,128], index: 1, kind: input, shape index: {}]
  %s2 = inlined_call_operand.vmem [shape: f32[1,128], index: 2, kind: input, shape index: {}]
  %s3 = inlined_call_operand.vmem [shape: f32[1152,128], index: 3, kind: input, shape index: {}]
  %s4 = inlined_call_operand.vmem [shape: f32[1,128], index: 4, kind: input, shape index: {}]
  %s5 = inlined_call_operand.vmem [shape: f32[2,16,16,128], index: 5, kind: output, shape index: {}]
  %s6 = sld [smem:[#allocation0]]
  $region86: #{double_conv_forward.1} parent=0
    _
  %s8 = ssub.s32 1, %s6
  %s9 = scalar_select 0, %s8, %s6
  loop: start=0, step=1, limit=6
  $region2: #{double_conv_forward.1} parent=0 // loop_pre_header
    _
  $region3: #{double_conv_forward.1} parent=0 // loop_header
    %s11 = sphi 0, %s15
    %p12 = scmp.ge.s32.totalorder %s11, 6
    %s18 = sphi 0, %s30
    %s19 = sphi 0, %s26
    %s20 = sphi 0, %s18
    %s21 = sphi 0, %s19
    %s22 = sphi 0, %s20
    %s23 = sphi 0, %s21
    %s31 = sphi 0, %s31
    %s33 = sphi 0, %s31
    %s34 = sphi 0, %s33
    %s48 = sphi 0, %s34
    %s52 = sphi 0, %s52
    %s54 = sphi 0, %s52
    %s55 = sphi 0, %s54
    %s69 = sphi 0, %s55
    %s73 = sphi 0, %s73
    %s75 = sphi 0, %s73
    %s76 = sphi 0, %s75
    %s90 = sphi 0, %s76
    %s94 = sphi 0, %s94
    %s96 = sphi 0, %s94
    %s97 = sphi 0, %s96
    %s111 = sphi 0, %s97
    %s119 = sphi 0, %s121
    %s122 = sphi 0, %s119
    %s123 = sphi 0, %s122
    %s139 = sphi 0, %s123
  $region4: #{double_conv_forward.1} parent=0 // loop_header_branch
    %14 = sbr.rel (%p12) target = $region8
  $region5: #{double_conv_forward.1} parent=0 // loop_body
    %s16 = ssub.s32 %s11, 1
    %s17 = ssub.s32 %s11, 2
    %s24 = sadd.s32 1, %s19
    %p25 = scmp.ge.s32.totalorder %s24, 2
    %s26 = scalar_select %p25, 0, %s24
    %s27 = sadd.s32 1, %s18
    %s28 = scalar_select %p25, %s27, %s18
    %p29 = scmp.ge.s32.totalorder %s28, 2
    %s30 = scalar_select %p29, 0, %s28
    %s32 = sadd.s32 %s31, 1
    %p35 = scmp.eq.s32.totalorder %s11, 3
    %p36 = scmp.ne.s32.totalorder %s31, %s33
    %p37 = scmp.eq.s32.totalorder %s11, 0
    %p38 = por %p36, %p37
    %p39 = scmp.ne.s32.totalorder %s31, %s33
    %p40 = scmp.eq.s32.totalorder %s16, 3
    %p41 = por %p39, %p40
    %p42 = scmp.ne.s32.totalorder %s33, %s34
    %p43 = scmp.eq.s32.totalorder %s16, 0
    %p44 = por %p42, %p43
    %p45 = scmp.ne.s32.totalorder %s33, %s34
    %p46 = scmp.eq.s32.totalorder %s17, 3
    %p47 = por %p45, %p46
    %p49 = scmp.ne.s32.totalorder %s34, %s48
    %p50 = scmp.eq.s32.totalorder %s17, 0
    %p51 = por %p49, %p50
    %s53 = sadd.s32 %s52, 1
    %p56 = scmp.eq.s32.totalorder %s11, 3
    %p57 = scmp.ne.s32.totalorder %s52, %s54
    %p58 = scmp.eq.s32.totalorder %s11, 0
    %p59 = por %p57, %p58
    %p60 = scmp.ne.s32.totalorder %s52, %s54
    %p61 = scmp.eq.s32.totalorder %s16, 3
    %p62 = por %p60, %p61
    %p63 = scmp.ne.s32.totalorder %s54, %s55
    %p64 = scmp.eq.s32.totalorder %s16, 0
    %p65 = por %p63, %p64
    %p66 = scmp.ne.s32.totalorder %s54, %s55
    %p67 = scmp.eq.s32.totalorder %s17, 3
    %p68 = por %p66, %p67
    %p70 = scmp.ne.s32.totalorder %s55, %s69
    %p71 = scmp.eq.s32.totalorder %s17, 0
    %p72 = por %p70, %p71
    %s74 = sadd.s32 %s73, 1
    %p77 = scmp.eq.s32.totalorder %s11, 3
    %p78 = scmp.ne.s32.totalorder %s73, %s75
    %p79 = scmp.eq.s32.totalorder %s11, 0
    %p80 = por %p78, %p79
    %p81 = scmp.ne.s32.totalorder %s73, %s75
    %p82 = scmp.eq.s32.totalorder %s16, 3
    %p83 = por %p81, %p82
    %p84 = scmp.ne.s32.totalorder %s75, %s76
    %p85 = scmp.eq.s32.totalorder %s16, 0
    %p86 = por %p84, %p85
    %p87 = scmp.ne.s32.totalorder %s75, %s76
    %p88 = scmp.eq.s32.totalorder %s17, 3
    %p89 = por %p87, %p88
    %p91 = scmp.ne.s32.totalorder %s76, %s90
    %p92 = scmp.eq.s32.totalorder %s17, 0
    %p93 = por %p91, %p92
    %s95 = sadd.s32 %s94, 1
    %p98 = scmp.eq.s32.totalorder %s11, 3
    %p99 = scmp.ne.s32.totalorder %s94, %s96
    %p100 = scmp.eq.s32.totalorder %s11, 0
    %p101 = por %p99, %p100
    %p102 = scmp.ne.s32.totalorder %s94, %s96
    %p103 = scmp.eq.s32.totalorder %s16, 3
    %p104 = por %p102, %p103
    %p105 = scmp.ne.s32.totalorder %s96, %s97
    %p106 = scmp.eq.s32.totalorder %s16, 0
    %p107 = por %p105, %p106
    %p108 = scmp.ne.s32.totalorder %s96, %s97
    %p109 = scmp.eq.s32.totalorder %s17, 3
    %p110 = por %p108, %p109
    %p112 = scmp.ne.s32.totalorder %s97, %s111
    %p113 = scmp.eq.s32.totalorder %s17, 0
    %p114 = por %p112, %p113
    %s115 = ssub.s32 %s18, %s30
    %s116 = ssub.s32 %s19, %s26
    %s117 = sor.u32 %s115, %s116
    %p118 = scmp.eq.s32.totalorder %s117, 0
    %s120 = sadd.s32 %s119, 1
    %s121 = scalar_select %p118, %s119, %s120
    %p124 = pneg %p118
    %p125 = scmp.eq.s32.totalorder %s11, 3
    %p126 = por %p124, %p125
    %p127 = scmp.ne.s32.totalorder %s119, %s122
    %p128 = scmp.eq.s32.totalorder %s11, 0
    %p129 = por %p127, %p128
    %p130 = scmp.ne.s32.totalorder %s119, %s122
    %p131 = scmp.eq.s32.totalorder %s16, 3
    %p132 = por %p130, %p131
    %p133 = scmp.ne.s32.totalorder %s122, %s123
    %p134 = scmp.eq.s32.totalorder %s16, 0
    %p135 = por %p133, %p134
    %p136 = scmp.ne.s32.totalorder %s122, %s123
    %p137 = scmp.eq.s32.totalorder %s17, 3
    %p138 = por %p136, %p137
    %p140 = scmp.ne.s32.totalorder %s123, %s139
    %p141 = scmp.eq.s32.totalorder %s17, 0
    %p142 = por %p140, %p141
    %p143 = scmp.le.s32.totalorder 1, %s11
    %p144 = scmp.lt.s32.totalorder %s11, 5
    %p145 = pnand %p143, %p144
    %p146 = pneg %p145
    // Predicated region
    $region9: #{double_conv_forward.1} parent=5 // pred_check
      _
    $region10: #{double_conv_forward.1} parent=5 // pred_check_branch
      %148 = sbr.rel (%p145) target = $region12
    $region11: #{double_conv_forward.1} parent=5 // pred_region
      %s149 = ssub.s32 %s11, 1
      // Predicated region
      $region13: #{double_conv_forward.1} parent=11 // pred_check
        %p150 = pneg %p44
      $region14: #{double_conv_forward.1} parent=11 // pred_check_branch
        %152 = sbr.rel (%p150) target = $region16
      $region15: #{double_conv_forward.1} parent=11 // pred_region
        _
      $region16: #{double_conv_forward.1} parent=11 // pred_fallthru
        _
      // Predicated region
      $region17: #{double_conv_forward.1} parent=11 // pred_check
        %p153 = pneg %p65
      $region18: #{double_conv_forward.1} parent=11 // pred_check_branch
        %155 = sbr.rel (%p153) target = $region20
      $region19: #{double_conv_forward.1} parent=11 // pred_region
        _
      $region20: #{double_conv_forward.1} parent=11 // pred_fallthru
        _
      // Predicated region
      $region21: #{double_conv_forward.1} parent=11 // pred_check
        %p156 = pneg %p86
      $region22: #{double_conv_forward.1} parent=11 // pred_check_branch
        %158 = sbr.rel (%p156) target = $region24
      $region23: #{double_conv_forward.1} parent=11 // pred_region
        _
      $region24: #{double_conv_forward.1} parent=11 // pred_fallthru
        _
      // Predicated region
      $region25: #{double_conv_forward.1} parent=11 // pred_check
        %p159 = pneg %p107
      $region26: #{double_conv_forward.1} parent=11 // pred_check_branch
        %161 = sbr.rel (%p159) target = $region28
      $region27: #{double_conv_forward.1} parent=11 // pred_region
        _
      $region28: #{double_conv_forward.1} parent=11 // pred_fallthru
        _
    $region12: #{double_conv_forward.1} parent=5 // pred_fallthru
      _
    %p162 = scmp.lt.s32.totalorder %s11, 4
    // Predicated region
    $region29: #{double_conv_forward.1} parent=5 // pred_check
      %p163 = pneg %p162
    $region30: #{double_conv_forward.1} parent=5 // pred_check_branch
      %165 = sbr.rel (%p163) target = $region32
    $region31: #{double_conv_forward.1} parent=5 // pred_region
      _
    $region32: #{double_conv_forward.1} parent=5 // pred_fallthru
      _
    %p166 = scmp.le.s32.totalorder 1, %s11
    %p167 = scmp.lt.s32.totalorder %s11, 5
    %p168 = pnand %p166, %p167
    %p169 = pneg %p168
    // Predicated region
    $region33: #{double_conv_forward.1} parent=5 // pred_check
      _
    $region34: #{double_conv_forward.1} parent=5 // pred_check_branch
      %171 = sbr.rel (%p168) target = $region36
    $region35: #{double_conv_forward.1} parent=5 // pred_region
      %s172 = ssub.s32 %s11, 1
      %p173 = pneg %p44
      %p174 = pneg %p41
      %p175 = pneg %p65
      %p176 = pneg %p62
      %p177 = pneg %p86
      %p178 = pneg %p83
      %p179 = pneg %p107
      %p180 = pneg %p104
      %p181 = pneg %p135
      %p182 = pneg %p132
      %s183 = smul.u32 8, %s21
      %p184 = scmp.lt.s32.totalorder %s20, 1
      %s185 = scalar_select %p184, %s20, 1
      %p186 = scmp.lt.s32.totalorder %s183, 15
      %s187 = scalar_select %p186, %s183, 15
      %s188 = smul.addr %s187, 2
      %s189 = smul.addr %s185, 32
      %s190 = sadd.s32 %s188, %s189
      %s191 = smul.addr %s190, 8
      %s192 = scalar_lea.vmem %s5, %s191
      %s193 = smul.u32 8, %s21
      %p194 = scmp.lt.s32.totalorder %s20, 1
      %s195 = scalar_select %p194, %s20, 1
      %p196 = scmp.lt.s32.totalorder %s193, 15
      %s197 = scalar_select %p196, %s193, 15
      %s198 = smul.addr %s197, 2
      %s199 = smul.addr %s195, 32
      %s200 = sadd.s32 %s198, %s199
      %s201 = smul.addr %s200, 8
      %s202 = scalar_lea.vmem %s5, %s201
      %s203 = smul.u32 8, %s21
      %s204 = smul.u32 %s20, 20
      %s205 = smul.u32 %s21, 8
      %s206 = sadd.s32 %s204, %s205
      %s207 = smul.u32 %s206, 24
      %s208 = scalar_lea.vmem %s0, %s207
      %p210 = scmp.lt.u32.totalorder 18, 8
      %p211 = pneg %p210
      // Predicated region
      $region37: #{double_conv_forward.1} parent=35 // pred_check
        _
      $region38: #{double_conv_forward.1} parent=35 // pred_check_branch
        %213 = sbr.rel (%p210) target = $region40
      $region39: #{double_conv_forward.1} parent=35 // pred_region
        %s251 = sand.u32 18, 7
        %p252 = scmp.eq.s32.totalorder %s251, 0
        %p253 = pneg %p252
        // Predicated region
        $region52: #{double_conv_forward.1} parent=39 // pred_check
          _
        $region53: #{double_conv_forward.1} parent=39 // pred_check_branch
          %255 = sbr.rel (%p252) target = $region55
        $region54: #{double_conv_forward.1} parent=39 // pred_region
          %s256 = sand.u32 18, 7
          %s257 = ssub.s32 18, %s256
          %s258 = scalar_lea.vmem %s208, %s257
          %s259 = ssub.s32 18, %s256
          %s260 = scalar_lea.vmem [#allocation2], %s259
          loop: start=0, step=1, limit=1
          $region56: #{double_conv_forward.1} parent=54 // loop_pre_header
            _
          $region57: #{double_conv_forward.1} parent=54 // loop_header
            %s262 = sphi 0, %s266
            %p263 = scmp.ge.s32.totalorder %s262, 1
            %s267 = sphi %s208, %s208
            %s268 = sphi [#allocation2], [#allocation2]
          $region58: #{double_conv_forward.1} parent=54 // loop_header_branch
            %265 = sbr.rel (%p263) target = $region62
          $region59: #{double_conv_forward.1} parent=54 // loop_body
            %v269 = vld [vmem:[%s267] sm:$0xff]
            %270 = vst [vmem:[%s268] sm:$0xff] %v269
            %v271 = vld [vmem:[%s267 + $0x8] sm:$0xff]
            %272 = vst [vmem:[%s268 + $0x8] sm:$0xff] %v271
            %v273 = vld [vmem:[%s267 + $0x18] sm:$0xff]
            %274 = vst [vmem:[%s268 + $0x18] sm:$0xff] %v273
            %v275 = vld [vmem:[%s267 + $0x20] sm:$0xff]
            %276 = vst [vmem:[%s268 + $0x20] sm:$0xff] %v275
            %v277 = vld [vmem:[%s267 + $0x30] sm:$0xff]
            %278 = vst [vmem:[%s268 + $0x30] sm:$0xff] %v277
            %v279 = vld [vmem:[%s267 + $0x38] sm:$0xff]
            %280 = vst [vmem:[%s268 + $0x38] sm:$0xff] %v279
            %v281 = vld [vmem:[%s267 + $0x48] sm:$0xff]
            %282 = vst [vmem:[%s268 + $0x48] sm:$0xff] %v281
            %v283 = vld [vmem:[%s267 + $0x50] sm:$0xff]
            %284 = vst [vmem:[%s268 + $0x50] sm:$0xff] %v283
            %v285 = vld [vmem:[%s267 + $0x60] sm:$0xff]
            %286 = vst [vmem:[%s268 + $0x60] sm:$0xff] %v285
            %v287 = vld [vmem:[%s267 + $0x68] sm:$0xff]
            %288 = vst [vmem:[%s268 + $0x68] sm:$0xff] %v287
            %v289 = vld [vmem:[%s267 + $0x78] sm:$0xff]
            %290 = vst [vmem:[%s268 + $0x78] sm:$0xff] %v289
            %v291 = vld [vmem:[%s267 + $0x80] sm:$0xff]
            %292 = vst [vmem:[%s268 + $0x80] sm:$0xff] %v291
            %v293 = vld [vmem:[%s267 + $0x90] sm:$0xff]
            %294 = vst [vmem:[%s268 + $0x90] sm:$0xff] %v293
            %v295 = vld [vmem:[%s267 + $0x98] sm:$0xff]
            %296 = vst [vmem:[%s268 + $0x98] sm:$0xff] %v295
            %v297 = vld [vmem:[%s267 + $0xa8] sm:$0xff]
            %298 = vst [vmem:[%s268 + $0xa8] sm:$0xff] %v297
            %v299 = vld [vmem:[%s267 + $0xb0] sm:$0xff]
            %300 = vst [vmem:[%s268 + $0xb0] sm:$0xff] %v299
            %v301 = vld [vmem:[%s267 + $0xc0] sm:$0xff]
            %302 = vst [vmem:[%s268 + $0xc0] sm:$0xff] %v301
            %v303 = vld [vmem:[%s267 + $0xc8] sm:$0xff]
            %304 = vst [vmem:[%s268 + $0xc8] sm:$0xff] %v303
            %v305 = vld [vmem:[%s267 + $0xd8] sm:$0xff]
            %306 = vst [vmem:[%s268 + $0xd8] sm:$0xff] %v305
            %v307 = vld [vmem:[%s267 + $0xe0] sm:$0xff]
            %308 = vst [vmem:[%s268 + $0xe0] sm:$0xff] %v307
            %v309 = vld [vmem:[%s267 + $0xf0] sm:$0xff]
            %310 = vst [vmem:[%s268 + $0xf0] sm:$0xff] %v309
            %v311 = vld [vmem:[%s267 + $0xf8] sm:$0xff]
            %312 = vst [vmem:[%s268 + $0xf8] sm:$0xff] %v311
            %v313 = vld [vmem:[%s267 + $0x108] sm:$0xff]
            %314 = vst [vmem:[%s268 + $0x108] sm:$0xff] %v313
            %v315 = vld [vmem:[%s267 + $0x110] sm:$0xff]
            %316 = vst [vmem:[%s268 + $0x110] sm:$0xff] %v315
          $region60: #{double_conv_forward.1} parent=54 // loop_footer
            %s266 = sadd.s32 1, %s262
          $region61: #{double_conv_forward.1} parent=54 // loop_footer_branch
            %261 = sbr.rel target = $region57
          $region62: #{double_conv_forward.1} parent=54 // loop_exit
            _
          %s317 = sshll.u32 1, %s256
          %s318 = ssub.s32 %s317, 1
          loop: start=0, step=1, limit=1
          $region63: #{double_conv_forward.1} parent=54 // loop_pre_header
            _
          $region64: #{double_conv_forward.1} parent=54 // loop_header
            %s320 = sphi 0, %s324
            %p321 = scmp.ge.s32.totalorder %s320, 1
            %s325 = sphi %s258, %s258
            %s326 = sphi %s260, %s260
          $region65: #{double_conv_forward.1} parent=54 // loop_header_branch
            %323 = sbr.rel (%p321) target = $region69
          $region66: #{double_conv_forward.1} parent=54 // loop_body
            %v327 = vld [vmem:[%s325] sm:%s318]
            %328 = vst [vmem:[%s326] sm:%s318] %v327
            %v329 = vld [vmem:[%s325 + $0x18] sm:%s318]
            %330 = vst [vmem:[%s326 + $0x18] sm:%s318] %v329
            %v331 = vld [vmem:[%s325 + $0x30] sm:%s318]
            %332 = vst [vmem:[%s326 + $0x30] sm:%s318] %v331
            %v333 = vld [vmem:[%s325 + $0x48] sm:%s318]
            %334 = vst [vmem:[%s326 + $0x48] sm:%s318] %v333
            %v335 = vld [vmem:[%s325 + $0x60] sm:%s318]
            %336 = vst [vmem:[%s326 + $0x60] sm:%s318] %v335
            %v337 = vld [vmem:[%s325 + $0x78] sm:%s318]
            %338 = vst [vmem:[%s326 + $0x78] sm:%s318] %v337
            %v339 = vld [vmem:[%s325 + $0x90] sm:%s318]
            %340 = vst [vmem:[%s326 + $0x90] sm:%s318] %v339
            %v341 = vld [vmem:[%s325 + $0xa8] sm:%s318]
            %342 = vst [vmem:[%s326 + $0xa8] sm:%s318] %v341
            %v343 = vld [vmem:[%s325 + $0xc0] sm:%s318]
            %344 = vst [vmem:[%s326 + $0xc0] sm:%s318] %v343
            %v345 = vld [vmem:[%s325 + $0xd8] sm:%s318]
            %346 = vst [vmem:[%s326 + $0xd8] sm:%s318] %v345
            %v347 = vld [vmem:[%s325 + $0xf0] sm:%s318]
            %348 = vst [vmem:[%s326 + $0xf0] sm:%s318] %v347
            %v349 = vld [vmem:[%s325 + $0x108] sm:%s318]
            %350 = vst [vmem:[%s326 + $0x108] sm:%s318] %v349
          $region67: #{double_conv_forward.1} parent=54 // loop_footer
            %s324 = sadd.s32 1, %s320
          $region68: #{double_conv_forward.1} parent=54 // loop_footer_branch
            %319 = sbr.rel target = $region64
          $region69: #{double_conv_forward.1} parent=54 // loop_exit
            _
        $region55: #{double_conv_forward.1} parent=39 // pred_fallthru
          _
      $region40: #{double_conv_forward.1} parent=35 // pred_fallthru
        _
      // Predicated region
      $region41: #{double_conv_forward.1} parent=35 // pred_check
        %p214 = pneg %p210
      $region42: #{double_conv_forward.1} parent=35 // pred_check_branch
        %216 = sbr.rel (%p214) target = $region44
      $region43: #{double_conv_forward.1} parent=35 // pred_region
        %s217 = sshll.u32 1, 18
        %s218 = ssub.s32 %s217, 1
        loop: start=0, step=1, limit=1
        $region45: #{double_conv_forward.1} parent=43 // loop_pre_header
          _
        $region46: #{double_conv_forward.1} parent=43 // loop_header
          %s220 = sphi 0, %s224
          %p221 = scmp.ge.s32.totalorder %s220, 1
          %s225 = sphi %s208, %s208
          %s226 = sphi [#allocation2], [#allocation2]
        $region47: #{double_conv_forward.1} parent=43 // loop_header_branch
          %223 = sbr.rel (%p221) target = $region51
        $region48: #{double_conv_forward.1} parent=43 // loop_body
          %v227 = vld [vmem:[%s225] sm:%s218]
          %228 = vst [vmem:[%s226] sm:%s218] %v227
          %v229 = vld [vmem:[%s225 + $0x18] sm:%s218]
          %230 = vst [vmem:[%s226 + $0x18] sm:%s218] %v229
          %v231 = vld [vmem:[%s225 + $0x30] sm:%s218]
          %232 = vst [vmem:[%s226 + $0x30] sm:%s218] %v231
          %v233 = vld [vmem:[%s225 + $0x48] sm:%s218]
          %234 = vst [vmem:[%s226 + $0x48] sm:%s218] %v233
          %v235 = vld [vmem:[%s225 + $0x60] sm:%s218]
          %236 = vst [vmem:[%s226 + $0x60] sm:%s218] %v235
          %v237 = vld [vmem:[%s225 + $0x78] sm:%s218]
          %238 = vst [vmem:[%s226 + $0x78] sm:%s218] %v237
          %v239 = vld [vmem:[%s225 + $0x90] sm:%s218]
          %240 = vst [vmem:[%s226 + $0x90] sm:%s218] %v239
          %v241 = vld [vmem:[%s225 + $0xa8] sm:%s218]
          %242 = vst [vmem:[%s226 + $0xa8] sm:%s218] %v241
          %v243 = vld [vmem:[%s225 + $0xc0] sm:%s218]
          %244 = vst [vmem:[%s226 + $0xc0] sm:%s218] %v243
          %v245 = vld [vmem:[%s225 + $0xd8] sm:%s218]
          %246 = vst [vmem:[%s226 + $0xd8] sm:%s218] %v245
          %v247 = vld [vmem:[%s225 + $0xf0] sm:%s218]
          %248 = vst [vmem:[%s226 + $0xf0] sm:%s218] %v247
          %v249 = vld [vmem:[%s225 + $0x108] sm:%s218]
          %250 = vst [vmem:[%s226 + $0x108] sm:%s218] %v249
        $region49: #{double_conv_forward.1} parent=43 // loop_footer
          %s224 = sadd.s32 1, %s220
        $region50: #{double_conv_forward.1} parent=43 // loop_footer_branch
          %219 = sbr.rel target = $region46
        $region51: #{double_conv_forward.1} parent=43 // loop_exit
          _
      $region44: #{double_conv_forward.1} parent=35 // pred_fallthru
        _
      // Predicated region
      $region70: #{double_conv_forward.1} parent=35 // pred_check
        _
      $region71: #{double_conv_forward.1} parent=35 // pred_check_branch
        %353 = sbr.rel (0) target = $region73
      $region72: #{double_conv_forward.1} parent=35 // pred_region
        %354 = vsyncadd [#allocation4], 3456
      $region73: #{double_conv_forward.1} parent=35 // pred_fallthru
        _
      %s355 = smul.u32 12, 18
      %s356 = smul.u32 %s355, 1
      %s357 = sshll.u32 %s356, 4
      %358 = dma.done [#allocation4], %s357
      %v359 = vld [vmem:[#allocation2] sm:$0xff]
      %v360 = vld [vmem:[#allocation2 + $0x8] sm:$0xff]
      %v361 = vld [vmem:[#allocation2 + $0x10] sm:$0x3]
      %v362 = vld [vmem:[#allocation2 + $0x18] sm:$0xff]
      %v363 = vld [vmem:[#allocation2 + $0x20] sm:$0xff]
      %v364 = vld [vmem:[#allocation2 + $0x28] sm:$0x3]
      %v365 = vld [vmem:[#allocation2 + $0x30] sm:$0xff]
      %v366 = vld [vmem:[#allocation2 + $0x38] sm:$0xff]
      %v367 = vld [vmem:[#allocation2 + $0x40] sm:$0x3]
      %v368 = vld [vmem:[#allocation2 + $0x48] sm:$0xff]
      %v369 = vld [vmem:[#allocation2 + $0x50] sm:$0xff]
      %v370 = vld [vmem:[#allocation2 + $0x58] sm:$0x3]
      %v371 = vld [vmem:[#allocation2 + $0x60] sm:$0xff]
      %v372 = vld [vmem:[#allocation2 + $0x68] sm:$0xff]
      %v373 = vld [vmem:[#allocation2 + $0x70] sm:$0x3]
      %v374 = vld [vmem:[#allocation2 + $0x78] sm:$0xff]
      %v375 = vld [vmem:[#allocation2 + $0x80] sm:$0xff]
      %v376 = vld [vmem:[#allocation2 + $0x88] sm:$0x3]
      %v377 = vld [vmem:[#allocation2 + $0x90] sm:$0xff]
      %v378 = vld [vmem:[#allocation2 + $0x98] sm:$0xff]
      %v379 = vld [vmem:[#allocation2 + $0xa0] sm:$0x3]
      %v380 = vld [vmem:[#allocation2 + $0xa8] sm:$0xff]
      %v381 = vld [vmem:[#allocation2 + $0xb0] sm:$0xff]
      %v382 = vld [vmem:[#allocation2 + $0xb8] sm:$0x3]
      %v383 = vld [vmem:[#allocation2 + $0xc0] sm:$0xff]
      %v384 = vld [vmem:[#allocation2 + $0xc8] sm:$0xff]
      %v385 = vld [vmem:[#allocation2 + $0xd0] sm:$0x3]
      %v386 = vld [vmem:[#allocation2 + $0xd8] sm:$0xff]
      %v387 = vld [vmem:[#allocation2 + $0xe0] sm:$0xff]
      %v388 = vld [vmem:[#allocation2 + $0xe8] sm:$0x3]
      %v389 = vld [vmem:[#allocation2 + $0xf0] sm:$0xff]
      %v390 = vld [vmem:[#allocation2 + $0xf8] sm:$0xff]
      %v391 = vld [vmem:[#allocation2 + $0x100] sm:$0x3]
      %v392 = vld [vmem:[#allocation2 + $0x108] sm:$0xff]
      %v393 = vld [vmem:[#allocation2 + $0x110] sm:$0xff]
      %v394 = vld [vmem:[#allocation2 + $0x118] sm:$0x3]
      %vm431 = vcmask 1046528
      %v432 = vrot.slane %v359, 1
      %v433 = vrot.slane %v360, 1
      %v434 = vsel %vm431, %v432, %v433
      %v435 = vrot.slane %v361, 1
      %v436 = vsel %vm431, %v433, %v435
      %v437 = vrot.slane %v362, 1
      %v438 = vrot.slane %v363, 1
      %v439 = vsel %vm431, %v437, %v438
      %v440 = vrot.slane %v364, 1
      %v441 = vsel %vm431, %v438, %v440
      %v442 = vrot.slane %v365, 1
      %v443 = vrot.slane %v366, 1
      %v444 = vsel %vm431, %v442, %v443
      %v445 = vrot.slane %v367, 1
      %v446 = vsel %vm431, %v443, %v445
      %v447 = vrot.slane %v368, 1
      %v448 = vrot.slane %v369, 1
      %v449 = vsel %vm431, %v447, %v448
      %v450 = vrot.slane %v370, 1
      %v451 = vsel %vm431, %v448, %v450
      %v452 = vrot.slane %v371, 1
      %v453 = vrot.slane %v372, 1
      %v454 = vsel %vm431, %v452, %v453
      %v455 = vrot.slane %v373, 1
      %v456 = vsel %vm431, %v453, %v455
      %v457 = vrot.slane %v374, 1
      %v458 = vrot.slane %v375, 1
      %v459 = vsel %vm431, %v457, %v458
      %v460 = vrot.slane %v376, 1
      %v461 = vsel %vm431, %v458, %v460
      %v462 = vrot.slane %v377, 1
      %v463 = vrot.slane %v378, 1
      %v464 = vsel %vm431, %v462, %v463
      %v465 = vrot.slane %v379, 1
      %v466 = vsel %vm431, %v463, %v465
      %v467 = vrot.slane %v380, 1
      %v468 = vrot.slane %v381, 1
      %v469 = vsel %vm431, %v467, %v468
      %v470 = vrot.slane %v382, 1
      %v471 = vsel %vm431, %v468, %v470
      %v472 = vrot.slane %v383, 1
      %v473 = vrot.slane %v384, 1
      %v474 = vsel %vm431, %v472, %v473
      %v475 = vrot.slane %v385, 1
      %v476 = vsel %vm431, %v473, %v475
      %v477 = vrot.slane %v386, 1
      %v478 = vrot.slane %v387, 1
      %v479 = vsel %vm431, %v477, %v478
      %v480 = vrot.slane %v388, 1
      %v481 = vsel %vm431, %v478, %v480
      %v482 = vrot.slane %v389, 1
      %v483 = vrot.slane %v390, 1
      %v484 = vsel %vm431, %v482, %v483
      %v485 = vrot.slane %v391, 1
      %v486 = vsel %vm431, %v483, %v485
      %v487 = vrot.slane %v392, 1
      %v488 = vrot.slane %v393, 1
      %v489 = vsel %vm431, %v487, %v488
      %v490 = vrot.slane %v394, 1
      %v491 = vsel %vm431, %v488, %v490
      %vm516 = vcmask 1045504
      %v517 = vrot.slane %v359, 2
      %v518 = vrot.slane %v360, 2
      %v519 = vsel %vm516, %v517, %v518
      %v520 = vrot.slane %v361, 2
      %v521 = vsel %vm516, %v518, %v520
      %v522 = vrot.slane %v362, 2
      %v523 = vrot.slane %v363, 2
      %v524 = vsel %vm516, %v522, %v523
      %v525 = vrot.slane %v364, 2
      %v526 = vsel %vm516, %v523, %v525
      %v527 = vrot.slane %v365, 2
      %v528 = vrot.slane %v366, 2
      %v529 = vsel %vm516, %v527, %v528
      %v530 = vrot.slane %v367, 2
      %v531 = vsel %vm516, %v528, %v530
      %v532 = vrot.slane %v368, 2
      %v533 = vrot.slane %v369, 2
      %v534 = vsel %vm516, %v532, %v533
      %v535 = vrot.slane %v370, 2
      %v536 = vsel %vm516, %v533, %v535
      %v537 = vrot.slane %v371, 2
      %v538 = vrot.slane %v372, 2
      %v539 = vsel %vm516, %v537, %v538
      %v540 = vrot.slane %v373, 2
      %v541 = vsel %vm516, %v538, %v540
      %v542 = vrot.slane %v374, 2
      %v543 = vrot.slane %v375, 2
      %v544 = vsel %vm516, %v542, %v543
      %v545 = vrot.slane %v376, 2
      %v546 = vsel %vm516, %v543, %v545
      %v547 = vrot.slane %v377, 2
      %v548 = vrot.slane %v378, 2
      %v549 = vsel %vm516, %v547, %v548
      %v550 = vrot.slane %v379, 2
      %v551 = vsel %vm516, %v548, %v550
      %v552 = vrot.slane %v380, 2
      %v553 = vrot.slane %v381, 2
      %v554 = vsel %vm516, %v552, %v553
      %v555 = vrot.slane %v382, 2
      %v556 = vsel %vm516, %v553, %v555
      %v557 = vrot.slane %v383, 2
      %v558 = vrot.slane %v384, 2
      %v559 = vsel %vm516, %v557, %v558
      %v560 = vrot.slane %v385, 2
      %v561 = vsel %vm516, %v558, %v560
      %v562 = vrot.slane %v386, 2
      %v563 = vrot.slane %v387, 2
      %v564 = vsel %vm516, %v562, %v563
      %v565 = vrot.slane %v388, 2
      %v566 = vsel %vm516, %v563, %v565
      %v567 = vrot.slane %v389, 2
      %v568 = vrot.slane %v390, 2
      %v569 = vsel %vm516, %v567, %v568
      %v570 = vrot.slane %v391, 2
      %v571 = vsel %vm516, %v568, %v570
      %v572 = vrot.slane %v392, 2
      %v573 = vrot.slane %v393, 2
      %v574 = vsel %vm516, %v572, %v573
      %v575 = vrot.slane %v394, 2
      %v576 = vsel %vm516, %v573, %v575
      %v601 = vld [vmem:[%s1] sm:$0xff]
      %v602 = vld [vmem:[%s1 + $0x8] sm:$0xff]
      %v603 = vld [vmem:[%s1 + $0x10] sm:$0xff]
      %v604 = vld [vmem:[%s1 + $0x18] sm:$0xff]
      %v605 = vld [vmem:[%s1 + $0x20] sm:$0xff]
      %v606 = vld [vmem:[%s1 + $0x28] sm:$0xff]
      %v607 = vld [vmem:[%s1 + $0x30] sm:$0xff]
      %v608 = vld [vmem:[%s1 + $0x38] sm:$0xff]
      %v609 = vld [vmem:[%s1 + $0x40] sm:$0xff]
      %v610 = vld [vmem:[%s1 + $0x48] sm:$0xff]
      %v611 = vld [vmem:[%s1 + $0x50] sm:$0xff]
      %v612 = vld [vmem:[%s1 + $0x58] sm:$0xff]
      %v613 = vld [vmem:[%s1 + $0x60] sm:$0xff]
      %v614 = vld [vmem:[%s1 + $0x68] sm:$0xff]
      %v615 = vld [vmem:[%s1 + $0x70] sm:$0xff]
      %v616 = vld [vmem:[%s1 + $0x78] sm:$0xff]
      %v617 = vld [vmem:[%s1 + $0x80] sm:$0xff]
      %v618 = vld [vmem:[%s1 + $0x88] sm:$0xff]
      %v619 = vld [vmem:[%s1 + $0x90] sm:$0xff]
      %v620 = vld [vmem:[%s1 + $0x98] sm:$0xff]
      %v621 = vld [vmem:[%s1 + $0xa0] sm:$0xff]
      %v622 = vld [vmem:[%s1 + $0xa8] sm:$0xff]
      %v623 = vld [vmem:[%s1 + $0xb0] sm:$0xff]
      %v624 = vld [vmem:[%s1 + $0xb8] sm:$0xff]
      %v625 = vld [vmem:[%s1 + $0xc0] sm:$0xff]
      %v626 = vld [vmem:[%s1 + $0xc8] sm:$0xff]
      %v627 = vld [vmem:[%s1 + $0xd0] sm:$0xff]
      %v628 = vld [vmem:[%s1 + $0xd8] sm:$0xff]
      %v629 = vld [vmem:[%s1 + $0xe0] sm:$0xff]
      %v630 = vld [vmem:[%s1 + $0xe8] sm:$0xff]
      %v631 = vld [vmem:[%s1 + $0xf0] sm:$0xff]
      %v632 = vld [vmem:[%s1 + $0xf8] sm:$0xff]
      %v633 = vld [vmem:[%s1 + $0x100] sm:$0xff]
      %v634 = vld [vmem:[%s1 + $0x108] sm:$0xff]
      %v635 = vld [vmem:[%s1 + $0x110] sm:$0xff]
      %v636 = vld [vmem:[%s1 + $0x118] sm:$0xff]
      %v637 = vld [vmem:[%s1 + $0x120] sm:$0xff]
      %v638 = vld [vmem:[%s1 + $0x128] sm:$0xff]
      %v639 = vld [vmem:[%s1 + $0x130] sm:$0xff]
      %v640 = vld [vmem:[%s1 + $0x138] sm:$0xff]
      %v641 = vld [vmem:[%s1 + $0x140] sm:$0xff]
      %v642 = vld [vmem:[%s1 + $0x148] sm:$0xff]
      %v643 = vld [vmem:[%s1 + $0x150] sm:$0xff]
      %v644 = vld [vmem:[%s1 + $0x158] sm:$0xff]
      %v645 = vld [vmem:[%s1 + $0x160] sm:$0xff]
      %v646 = vld [vmem:[%s1 + $0x168] sm:$0xff]
      %v647 = vld [vmem:[%s1 + $0x170] sm:$0xff]
      %v648 = vld [vmem:[%s1 + $0x178] sm:$0xff]
      %v649 = vld [vmem:[%s1 + $0x180] sm:$0xff]
      %v650 = vld [vmem:[%s1 + $0x188] sm:$0xff]
      %v651 = vld [vmem:[%s1 + $0x190] sm:$0xff]
      %v652 = vld [vmem:[%s1 + $0x198] sm:$0xff]
      %v653 = vld [vmem:[%s1 + $0x1a0] sm:$0xff]
      %v654 = vld [vmem:[%s1 + $0x1a8] sm:$0xff]
      %v655 = vld [vmem:[%s1 + $0x1b0] sm:$0xff]
      %v656 = vld [vmem:[%s1 + $0x1b8] sm:$0xff]
      %v657 = vld [vmem:[%s1 + $0x1c0] sm:$0xff]
      %v658 = vld [vmem:[%s1 + $0x1c8] sm:$0xff]
      %v659 = vld [vmem:[%s1 + $0x1d0] sm:$0xff]
      %v660 = vld [vmem:[%s1 + $0x1d8] sm:$0xff]
      %v661 = vld [vmem:[%s1 + $0x1e0] sm:$0xff]
      %v662 = vld [vmem:[%s1 + $0x1e8] sm:$0xff]
      %v663 = vld [vmem:[%s1 + $0x1f0] sm:$0xff]
      %v664 = vld [vmem:[%s1 + $0x1f8] sm:$0xff]
      %v665 = vld [vmem:[%s1 + $0x200] sm:$0xff]
      %v666 = vld [vmem:[%s1 + $0x208] sm:$0xff]
      %v667 = vld [vmem:[%s1 + $0x210] sm:$0xff]
      %v668 = vld [vmem:[%s1 + $0x218] sm:$0xff]
      %v669 = vld [vmem:[%s1 + $0x220] sm:$0xff]
      %v670 = vld [vmem:[%s1 + $0x228] sm:$0xff]
      %v671 = vld [vmem:[%s1 + $0x230] sm:$0xff]
      %v672 = vld [vmem:[%s1 + $0x238] sm:$0xff]
      %v673 = vld [vmem:[%s1 + $0x240] sm:$0xff]
      %v674 = vld [vmem:[%s1 + $0x248] sm:$0xff]
      %v675 = vld [vmem:[%s1 + $0x250] sm:$0xff]
      %v676 = vld [vmem:[%s1 + $0x258] sm:$0xff]
      %v677 = vld [vmem:[%s1 + $0x260] sm:$0xff]
      %v678 = vld [vmem:[%s1 + $0x268] sm:$0xff]
      %v679 = vld [vmem:[%s1 + $0x270] sm:$0xff]
      %v680 = vld [vmem:[%s1 + $0x278] sm:$0xff]
      %v681 = vld [vmem:[%s1 + $0x280] sm:$0xff]
      %v682 = vld [vmem:[%s1 + $0x288] sm:$0xff]
      %v683 = vld [vmem:[%s1 + $0x290] sm:$0xff]
      %v684 = vld [vmem:[%s1 + $0x298] sm:$0xff]
      %v685 = vld [vmem:[%s1 + $0x2a0] sm:$0xff]
      %v686 = vld [vmem:[%s1 + $0x2a8] sm:$0xff]
      %v687 = vld [vmem:[%s1 + $0x2b0] sm:$0xff]
      %v688 = vld [vmem:[%s1 + $0x2b8] sm:$0xff]
      %v689 = vld [vmem:[%s1 + $0x2c0] sm:$0xff]
      %v690 = vld [vmem:[%s1 + $0x2c8] sm:$0xff]
      %v691 = vld [vmem:[%s1 + $0x2d0] sm:$0xff]
      %v692 = vld [vmem:[%s1 + $0x2d8] sm:$0xff]
      %v693 = vld [vmem:[%s1 + $0x2e0] sm:$0xff]
      %v694 = vld [vmem:[%s1 + $0x2e8] sm:$0xff]
      %v695 = vld [vmem:[%s1 + $0x2f0] sm:$0xff]
      %v696 = vld [vmem:[%s1 + $0x2f8] sm:$0xff]
      %v697 = vld [vmem:[%s1 + $0x300] sm:$0xff]
      %v698 = vld [vmem:[%s1 + $0x308] sm:$0xff]
      %v699 = vld [vmem:[%s1 + $0x310] sm:$0xff]
      %v700 = vld [vmem:[%s1 + $0x318] sm:$0xff]
      %v701 = vld [vmem:[%s1 + $0x320] sm:$0xff]
      %v702 = vld [vmem:[%s1 + $0x328] sm:$0xff]
      %v703 = vld [vmem:[%s1 + $0x330] sm:$0xff]
      %v704 = vld [vmem:[%s1 + $0x338] sm:$0xff]
      %v705 = vld [vmem:[%s1 + $0x340] sm:$0xff]
      %v706 = vld [vmem:[%s1 + $0x348] sm:$0xff]
      %v707 = vld [vmem:[%s1 + $0x350] sm:$0xff]
      %v708 = vld [vmem:[%s1 + $0x358] sm:$0xff]
      %v709 = vld [vmem:[%s1 + $0x360] sm:$0xff]
      %v710 = vld [vmem:[%s1 + $0x368] sm:$0xff]
      %v711 = vld [vmem:[%s1 + $0x370] sm:$0xff]
      %v712 = vld [vmem:[%s1 + $0x378] sm:$0xff]
      %v713 = vld [vmem:[%s1 + $0x380] sm:$0xff]
      %v714 = vld [vmem:[%s1 + $0x388] sm:$0xff]
      %v715 = vld [vmem:[%s1 + $0x390] sm:$0xff]
      %v716 = vld [vmem:[%s1 + $0x398] sm:$0xff]
      %v717 = vld [vmem:[%s1 + $0x3a0] sm:$0xff]
      %v718 = vld [vmem:[%s1 + $0x3a8] sm:$0xff]
      %v719 = vld [vmem:[%s1 + $0x3b0] sm:$0xff]
      %v720 = vld [vmem:[%s1 + $0x3b8] sm:$0xff]
      %v721 = vld [vmem:[%s1 + $0x3c0] sm:$0xff]
      %v722 = vld [vmem:[%s1 + $0x3c8] sm:$0xff]
      %v723 = vld [vmem:[%s1 + $0x3d0] sm:$0xff]
      %v724 = vld [vmem:[%s1 + $0x3d8] sm:$0xff]
      %v725 = vld [vmem:[%s1 + $0x3e0] sm:$0xff]
      %v726 = vld [vmem:[%s1 + $0x3e8] sm:$0xff]
      %v727 = vld [vmem:[%s1 + $0x3f0] sm:$0xff]
      %v728 = vld [vmem:[%s1 + $0x3f8] sm:$0xff]
      %v729 = vld [vmem:[%s1 + $0x400] sm:$0xff]
      %v730 = vld [vmem:[%s1 + $0x408] sm:$0xff]
      %v731 = vld [vmem:[%s1 + $0x410] sm:$0xff]
      %v732 = vld [vmem:[%s1 + $0x418] sm:$0xff]
      %v733 = vld [vmem:[%s1 + $0x420] sm:$0xff]
      %v734 = vld [vmem:[%s1 + $0x428] sm:$0xff]
      %v735 = vld [vmem:[%s1 + $0x430] sm:$0xff]
      %v736 = vld [vmem:[%s1 + $0x438] sm:$0xff]
      %v737 = vld [vmem:[%s1 + $0x440] sm:$0xff]
      %v738 = vld [vmem:[%s1 + $0x448] sm:$0xff]
      %v739 = vld [vmem:[%s1 + $0x450] sm:$0xff]
      %v740 = vld [vmem:[%s1 + $0x458] sm:$0xff]
      %v741 = vld [vmem:[%s1 + $0x460] sm:$0xff]
      %v742 = vld [vmem:[%s1 + $0x468] sm:$0xff]
      %v743 = vld [vmem:[%s1 + $0x470] sm:$0xff]
      %v744 = vld [vmem:[%s1 + $0x478] sm:$0xff]
      %v745 = vld [vmem:[%s2] sm:$0x1]
      %v747 = vlaneseq
      %v748 = vshrl.u32 %v747, 7
      %v749 = vsub.s32 0, %v748
      %v750 = vrot.slane %v745, %v749
      %752 = vmatprep.subr.mxu0 0.0
      %753 = vmatpush1.msra.mxu0 %v616
      %754 = vmatprep.subr.mxu0 0.0
      %755 = vmatpush1.msra.mxu0 %v615
      %756 = vmatprep.subr.mxu0 0.0
      %757 = vmatpush1.msra.mxu0 %v614
      %758 = vmatprep.subr.mxu0 0.0
      %759 = vmatpush1.msra.mxu0 %v613
      %760 = vmatprep.subr.mxu0 0.0
      %761 = vmatpush1.msra.mxu0 %v612
      %762 = vmatprep.subr.mxu0 0.0
      %763 = vmatpush1.msra.mxu0 %v611
      %764 = vmatprep.subr.mxu0 0.0
      %765 = vmatpush1.msra.mxu0 %v610
      %766 = vmatprep.subr.mxu0 0.0
      %767 = vmatpush1.msra.mxu0 %v609
      %768 = vmatprep.subr.mxu0 0.0
      %769 = vmatpush1.msra.mxu0 %v608
      %770 = vmatprep.subr.mxu0 0.0
      %771 = vmatpush1.msra.mxu0 %v607
      %772 = vmatprep.subr.mxu0 0.0
      %773 = vmatpush1.msra.mxu0 %v606
      %774 = vmatprep.subr.mxu0 0.0
      %775 = vmatpush1.msra.mxu0 %v605
      %776 = vmatprep.subr.mxu0 0.0
      %777 = vmatpush1.msra.mxu0 %v604
      %778 = vmatprep.subr.mxu0 0.0
      %779 = vmatpush1.msra.mxu0 %v603
      %780 = vmatprep.subr.mxu0 0.0
      %781 = vmatpush1.msra.mxu0 %v602
      %782 = vmatprep.subr.mxu0 0.0
      %783 = vmatpush1.msra.mxu0 %v601
      %784 = vmatprep.subr.mxu0 0.0
      %785 = vmatpush2.msra.mxu0 %v632
      %786 = vmatprep.subr.mxu0 0.0
      %787 = vmatpush2.msra.mxu0 %v631
      %788 = vmatprep.subr.mxu0 0.0
      %789 = vmatpush2.msra.mxu0 %v630
      %790 = vmatprep.subr.mxu0 0.0
      %791 = vmatpush2.msra.mxu0 %v629
      %792 = vmatprep.subr.mxu0 0.0
      %793 = vmatpush2.msra.mxu0 %v628
      %794 = vmatprep.subr.mxu0 0.0
      %795 = vmatpush2.msra.mxu0 %v627
      %796 = vmatprep.subr.mxu0 0.0
      %797 = vmatpush2.msra.mxu0 %v626
      %798 = vmatprep.subr.mxu0 0.0
      %799 = vmatpush2.msra.mxu0 %v625
      %800 = vmatprep.subr.mxu0 0.0
      %801 = vmatpush2.msra.mxu0 %v624
      %802 = vmatprep.subr.mxu0 0.0
      %803 = vmatpush2.msra.mxu0 %v623
      %804 = vmatprep.subr.mxu0 0.0
      %805 = vmatpush2.msra.mxu0 %v622
      %806 = vmatprep.subr.mxu0 0.0
      %807 = vmatpush2.msra.mxu0 %v621
      %808 = vmatprep.subr.mxu0 0.0
      %809 = vmatpush2.msra.mxu0 %v620
      %810 = vmatprep.subr.mxu0 0.0
      %811 = vmatpush2.msra.mxu0 %v619
      %812 = vmatprep.subr.mxu0 0.0
      %813 = vmatpush2.msra.mxu0 %v618
      %814 = vmatprep.subr.mxu0 0.0
      %815 = vmatpush2.msra.mxu0 %v617
      %816 = vmatprep.mubr.f32.mxu0 %v434
      %817 = vmatmul.mubr.f32.gmra.mxu0 %v359
      %v818 = vpop.f32.mrf.mxu0
      %v819 = vadd.f32 %v750, %v818
      %v820 = vpop.f32.mrf.mxu0
      %821 = vmatprep.mubr.f32.mxu0 %v436
      %822 = vmatmul.mubr.f32.gmra.mxu0 %v360
      %v823 = vpop.f32.mrf.mxu0
      %v824 = vadd.f32 %v750, %v823
      %v825 = vpop.f32.mrf.mxu0
      %826 = vmatprep.mubr.f32.mxu0 %v439
      %827 = vmatmul.mubr.f32.gmra.mxu0 %v362
      %v828 = vpop.f32.mrf.mxu0
      %v829 = vadd.f32 %v750, %v828
      %v830 = vpop.f32.mrf.mxu0
      %831 = vmatprep.mubr.f32.mxu0 %v441
      %832 = vmatmul.mubr.f32.gmra.mxu0 %v363
      %v833 = vpop.f32.mrf.mxu0
      %v834 = vadd.f32 %v750, %v833
      %v835 = vpop.f32.mrf.mxu0
      %836 = vmatprep.mubr.f32.mxu0 %v444
      %837 = vmatmul.mubr.f32.gmra.mxu0 %v365
      %v838 = vpop.f32.mrf.mxu0
      %v839 = vadd.f32 %v750, %v838
      %v840 = vpop.f32.mrf.mxu0
      %841 = vmatprep.mubr.f32.mxu0 %v446
      %842 = vmatmul.mubr.f32.gmra.mxu0 %v366
      %v843 = vpop.f32.mrf.mxu0
      %v844 = vadd.f32 %v750, %v843
      %v845 = vpop.f32.mrf.mxu0
      %846 = vmatprep.mubr.f32.mxu0 %v449
      %847 = vmatmul.mubr.f32.gmra.mxu0 %v368
      %v848 = vpop.f32.mrf.mxu0
      %v849 = vadd.f32 %v750, %v848
      %v850 = vpop.f32.mrf.mxu0
      %851 = vmatprep.mubr.f32.mxu0 %v451
      %852 = vmatmul.mubr.f32.gmra.mxu0 %v369
      %v853 = vpop.f32.mrf.mxu0
      %v854 = vadd.f32 %v750, %v853
      %v855 = vpop.f32.mrf.mxu0
      %856 = vmatprep.mubr.f32.mxu0 %v454
      %857 = vmatmul.mubr.f32.gmra.mxu0 %v371
      %v858 = vpop.f32.mrf.mxu0
      %v859 = vadd.f32 %v750, %v858
      %v860 = vpop.f32.mrf.mxu0
      %861 = vmatprep.mubr.f32.mxu0 %v456
      %862 = vmatmul.mubr.f32.gmra.mxu0 %v372
      %v863 = vpop.f32.mrf.mxu0
      %v864 = vadd.f32 %v750, %v863
      %v865 = vpop.f32.mrf.mxu0
      %866 = vmatprep.mubr.f32.mxu0 %v459
      %867 = vmatmul.mubr.f32.gmra.mxu0 %v374
      %v868 = vpop.f32.mrf.mxu0
      %v869 = vadd.f32 %v750, %v868
      %v870 = vpop.f32.mrf.mxu0
      %871 = vmatprep.mubr.f32.mxu0 %v461
      %872 = vmatmul.mubr.f32.gmra.mxu0 %v375
      %v873 = vpop.f32.mrf.mxu0
      %v874 = vadd.f32 %v750, %v873
      %v875 = vpop.f32.mrf.mxu0
      %876 = vmatprep.mubr.f32.mxu0 %v464
      %877 = vmatmul.mubr.f32.gmra.mxu0 %v377
      %v878 = vpop.f32.mrf.mxu0
      %v879 = vadd.f32 %v750, %v878
      %v880 = vpop.f32.mrf.mxu0
      %881 = vmatprep.mubr.f32.mxu0 %v466
      %882 = vmatmul.mubr.f32.gmra.mxu0 %v378
      %v883 = vpop.f32.mrf.mxu0
      %v884 = vadd.f32 %v750, %v883
      %v885 = vpop.f32.mrf.mxu0
      %886 = vmatprep.mubr.f32.mxu0 %v469
      %887 = vmatmul.mubr.f32.gmra.mxu0 %v380
      %v888 = vpop.f32.mrf.mxu0
      %v889 = vadd.f32 %v750, %v888
      %v890 = vpop.f32.mrf.mxu0
      %891 = vmatprep.mubr.f32.mxu0 %v471
      %892 = vmatmul.mubr.f32.gmra.mxu0 %v381
      %v893 = vpop.f32.mrf.mxu0
      %v894 = vadd.f32 %v750, %v893
      %v895 = vpop.f32.mrf.mxu0
      %896 = vmatprep.mubr.f32.mxu0 %v474
      %897 = vmatmul.mubr.f32.gmra.mxu0 %v383
      %v898 = vpop.f32.mrf.mxu0
      %v899 = vadd.f32 %v750, %v898
      %v900 = vpop.f32.mrf.mxu0
      %901 = vmatprep.mubr.f32.mxu0 %v476
      %902 = vmatmul.mubr.f32.gmra.mxu0 %v384
      %v903 = vpop.f32.mrf.mxu0
      %v904 = vadd.f32 %v750, %v903
      %v905 = vpop.f32.mrf.mxu0
      %906 = vmatprep.mubr.f32.mxu0 %v479
      %907 = vmatmul.mubr.f32.gmra.mxu0 %v386
      %v908 = vpop.f32.mrf.mxu0
      %v909 = vadd.f32 %v750, %v908
      %v910 = vpop.f32.mrf.mxu0
      %911 = vmatprep.mubr.f32.mxu0 %v481
      %912 = vmatmul.mubr.f32.gmra.mxu0 %v387
      %v913 = vpop.f32.mrf.mxu0
      %v914 = vadd.f32 %v750, %v913
      %v915 = vpop.f32.mrf.mxu0
      %916 = vdwg.mxu0
      %917 = vmatprep.subr.mxu0 0.0
      %918 = vmatpush1.msra.mxu0 %v648
      %919 = vmatprep.subr.mxu0 0.0
      %920 = vmatpush1.msra.mxu0 %v647
      %921 = vmatprep.subr.mxu0 0.0
      %922 = vmatpush1.msra.mxu0 %v646
      %923 = vmatprep.subr.mxu0 0.0
      %924 = vmatpush1.msra.mxu0 %v645
      %925 = vmatprep.subr.mxu0 0.0
      %926 = vmatpush1.msra.mxu0 %v644
      %927 = vmatprep.subr.mxu0 0.0
      %928 = vmatpush1.msra.mxu0 %v643
      %929 = vmatprep.subr.mxu0 0.0
      %930 = vmatpush1.msra.mxu0 %v642
      %931 = vmatprep.subr.mxu0 0.0
      %932 = vmatpush1.msra.mxu0 %v641
      %933 = vmatprep.subr.mxu0 0.0
      %934 = vmatpush1.msra.mxu0 %v640
      %935 = vmatprep.subr.mxu0 0.0
      %936 = vmatpush1.msra.mxu0 %v639
      %937 = vmatprep.subr.mxu0 0.0
      %938 = vmatpush1.msra.mxu0 %v638
      %939 = vmatprep.subr.mxu0 0.0
      %940 = vmatpush1.msra.mxu0 %v637
      %941 = vmatprep.subr.mxu0 0.0
      %942 = vmatpush1.msra.mxu0 %v636
      %943 = vmatprep.subr.mxu0 0.0
      %944 = vmatpush1.msra.mxu0 %v635
      %945 = vmatprep.subr.mxu0 0.0
      %946 = vmatpush1.msra.mxu0 %v634
      %947 = vmatprep.subr.mxu0 0.0
      %948 = vmatpush1.msra.mxu0 %v633
      %949 = vmatprep.subr.mxu0 0.0
      %950 = vmatpush2.msra.mxu0 %v664
      %951 = vmatprep.subr.mxu0 0.0
      %952 = vmatpush2.msra.mxu0 %v663
      %953 = vmatprep.subr.mxu0 0.0
      %954 = vmatpush2.msra.mxu0 %v662
      %955 = vmatprep.subr.mxu0 0.0
      %956 = vmatpush2.msra.mxu0 %v661
      %957 = vmatprep.subr.mxu0 0.0
      %958 = vmatpush2.msra.mxu0 %v660
      %959 = vmatprep.subr.mxu0 0.0
      %960 = vmatpush2.msra.mxu0 %v659
      %961 = vmatprep.subr.mxu0 0.0
      %962 = vmatpush2.msra.mxu0 %v658
      %963 = vmatprep.subr.mxu0 0.0
      %964 = vmatpush2.msra.mxu0 %v657
      %965 = vmatprep.subr.mxu0 0.0
      %966 = vmatpush2.msra.mxu0 %v656
      %967 = vmatprep.subr.mxu0 0.0
      %968 = vmatpush2.msra.mxu0 %v655
      %969 = vmatprep.subr.mxu0 0.0
      %970 = vmatpush2.msra.mxu0 %v654
      %971 = vmatprep.subr.mxu0 0.0
      %972 = vmatpush2.msra.mxu0 %v653
      %973 = vmatprep.subr.mxu0 0.0
      %974 = vmatpush2.msra.mxu0 %v652
      %975 = vmatprep.subr.mxu0 0.0
      %976 = vmatpush2.msra.mxu0 %v651
      %977 = vmatprep.subr.mxu0 0.0
      %978 = vmatpush2.msra.mxu0 %v650
      %979 = vmatprep.subr.mxu0 0.0
      %980 = vmatpush2.msra.mxu0 %v649
      %981 = vmatprep.mubr.f32.mxu0 %v362
      %982 = vmatmul.mubr.f32.gmra.mxu0 %v519
      %v983 = vpop.f32.mrf.mxu0
      %v984 = vadd.f32 %v819, %v983
      %v985 = vpop.f32.mrf.mxu0
      %986 = vmatprep.mubr.f32.mxu0 %v363
      %987 = vmatmul.mubr.f32.gmra.mxu0 %v521
      %v988 = vpop.f32.mrf.mxu0
      %v989 = vadd.f32 %v824, %v988
      %v990 = vpop.f32.mrf.mxu0
      %991 = vmatprep.mubr.f32.mxu0 %v365
      %992 = vmatmul.mubr.f32.gmra.mxu0 %v524
      %v993 = vpop.f32.mrf.mxu0
      %v994 = vadd.f32 %v829, %v993
      %v995 = vpop.f32.mrf.mxu0
      %996 = vmatprep.mubr.f32.mxu0 %v366
      %997 = vmatmul.mubr.f32.gmra.mxu0 %v526
      %v998 = vpop.f32.mrf.mxu0
      %v999 = vadd.f32 %v834, %v998
      %v1000 = vpop.f32.mrf.mxu0
      %1001 = vmatprep.mubr.f32.mxu0 %v368
      %1002 = vmatmul.mubr.f32.gmra.mxu0 %v529
      %v1003 = vpop.f32.mrf.mxu0
      %v1004 = vadd.f32 %v839, %v1003
      %v1005 = vpop.f32.mrf.mxu0
      %1006 = vmatprep.mubr.f32.mxu0 %v369
      %1007 = vmatmul.mubr.f32.gmra.mxu0 %v531
      %v1008 = vpop.f32.mrf.mxu0
      %v1009 = vadd.f32 %v844, %v1008
      %v1010 = vpop.f32.mrf.mxu0
      %1011 = vmatprep.mubr.f32.mxu0 %v371
      %1012 = vmatmul.mubr.f32.gmra.mxu0 %v534
      %v1013 = vpop.f32.mrf.mxu0
      %v1014 = vadd.f32 %v849, %v1013
      %v1015 = vpop.f32.mrf.mxu0
      %1016 = vmatprep.mubr.f32.mxu0 %v372
      %1017 = vmatmul.mubr.f32.gmra.mxu0 %v536
      %v1018 = vpop.f32.mrf.mxu0
      %v1019 = vadd.f32 %v854, %v1018
      %v1020 = vpop.f32.mrf.mxu0
      %1021 = vmatprep.mubr.f32.mxu0 %v374
      %1022 = vmatmul.mubr.f32.gmra.mxu0 %v539
      %v1023 = vpop.f32.mrf.mxu0
      %v1024 = vadd.f32 %v859, %v1023
      %v1025 = vpop.f32.mrf.mxu0
      %1026 = vmatprep.mubr.f32.mxu0 %v375
      %1027 = vmatmul.mubr.f32.gmra.mxu0 %v541
      %v1028 = vpop.f32.mrf.mxu0
      %v1029 = vadd.f32 %v864, %v1028
      %v1030 = vpop.f32.mrf.mxu0
      %1031 = vmatprep.mubr.f32.mxu0 %v377
      %1032 = vmatmul.mubr.f32.gmra.mxu0 %v544
      %v1033 = vpop.f32.mrf.mxu0
      %v1034 = vadd.f32 %v869, %v1033
      %v1035 = vpop.f32.mrf.mxu0
      %1036 = vmatprep.mubr.f32.mxu0 %v378
      %1037 = vmatmul.mubr.f32.gmra.mxu0 %v546
      %v1038 = vpop.f32.mrf.mxu0
      %v1039 = vadd.f32 %v874, %v1038
      %v1040 = vpop.f32.mrf.mxu0
      %1041 = vmatprep.mubr.f32.mxu0 %v380
      %1042 = vmatmul.mubr.f32.gmra.mxu0 %v549
      %v1043 = vpop.f32.mrf.mxu0
      %v1044 = vadd.f32 %v879, %v1043
      %v1045 = vpop.f32.mrf.mxu0
      %1046 = vmatprep.mubr.f32.mxu0 %v381
      %1047 = vmatmul.mubr.f32.gmra.mxu0 %v551
      %v1048 = vpop.f32.mrf.mxu0
      %v1049 = vadd.f32 %v884, %v1048
      %v1050 = vpop.f32.mrf.mxu0
      %1051 = vmatprep.mubr.f32.mxu0 %v383
      %1052 = vmatmul.mubr.f32.gmra.mxu0 %v554
      %v1053 = vpop.f32.mrf.mxu0
      %v1054 = vadd.f32 %v889, %v1053
      %v1055 = vpop.f32.mrf.mxu0
      %1056 = vmatprep.mubr.f32.mxu0 %v384
      %1057 = vmatmul.mubr.f32.gmra.mxu0 %v556
      %v1058 = vpop.f32.mrf.mxu0
      %v1059 = vadd.f32 %v894, %v1058
      %v1060 = vpop.f32.mrf.mxu0
      %1061 = vmatprep.mubr.f32.mxu0 %v386
      %1062 = vmatmul.mubr.f32.gmra.mxu0 %v559
      %v1063 = vpop.f32.mrf.mxu0
      %v1064 = vadd.f32 %v899, %v1063
      %v1065 = vpop.f32.mrf.mxu0
      %1066 = vmatprep.mubr.f32.mxu0 %v387
      %1067 = vmatmul.mubr.f32.gmra.mxu0 %v561
      %v1068 = vpop.f32.mrf.mxu0
      %v1069 = vadd.f32 %v904, %v1068
      %v1070 = vpop.f32.mrf.mxu0
      %1071 = vmatprep.mubr.f32.mxu0 %v389
      %1072 = vmatmul.mubr.f32.gmra.mxu0 %v564
      %v1073 = vpop.f32.mrf.mxu0
      %v1074 = vadd.f32 %v909, %v1073
      %v1075 = vpop.f32.mrf.mxu0
      %1076 = vmatprep.mubr.f32.mxu0 %v390
      %1077 = vmatmul.mubr.f32.gmra.mxu0 %v566
      %v1078 = vpop.f32.mrf.mxu0
      %v1079 = vadd.f32 %v914, %v1078
      %v1080 = vpop.f32.mrf.mxu0
      %1081 = vdwg.mxu0
      %1082 = vmatprep.subr.mxu0 0.0
      %1083 = vmatpush1.msra.mxu0 %v680
      %1084 = vmatprep.subr.mxu0 0.0
      %1085 = vmatpush1.msra.mxu0 %v679
      %1086 = vmatprep.subr.mxu0 0.0
      %1087 = vmatpush1.msra.mxu0 %v678
      %1088 = vmatprep.subr.mxu0 0.0
      %1089 = vmatpush1.msra.mxu0 %v677
      %1090 = vmatprep.subr.mxu0 0.0
      %1091 = vmatpush1.msra.mxu0 %v676
      %1092 = vmatprep.subr.mxu0 0.0
      %1093 = vmatpush1.msra.mxu0 %v675
      %1094 = vmatprep.subr.mxu0 0.0
      %1095 = vmatpush1.msra.mxu0 %v674
      %1096 = vmatprep.subr.mxu0 0.0
      %1097 = vmatpush1.msra.mxu0 %v673
      %1098 = vmatprep.subr.mxu0 0.0
      %1099 = vmatpush1.msra.mxu0 %v672
      %1100 = vmatprep.subr.mxu0 0.0
      %1101 = vmatpush1.msra.mxu0 %v671
      %1102 = vmatprep.subr.mxu0 0.0
      %1103 = vmatpush1.msra.mxu0 %v670
      %1104 = vmatprep.subr.mxu0 0.0
      %1105 = vmatpush1.msra.mxu0 %v669
      %1106 = vmatprep.subr.mxu0 0.0
      %1107 = vmatpush1.msra.mxu0 %v668
      %1108 = vmatprep.subr.mxu0 0.0
      %1109 = vmatpush1.msra.mxu0 %v667
      %1110 = vmatprep.subr.mxu0 0.0
      %1111 = vmatpush1.msra.mxu0 %v666
      %1112 = vmatprep.subr.mxu0 0.0
      %1113 = vmatpush1.msra.mxu0 %v665
      %1114 = vmatprep.subr.mxu0 0.0
      %1115 = vmatpush2.msra.mxu0 %v696
      %1116 = vmatprep.subr.mxu0 0.0
      %1117 = vmatpush2.msra.mxu0 %v695
      %1118 = vmatprep.subr.mxu0 0.0
      %1119 = vmatpush2.msra.mxu0 %v694
      %1120 = vmatprep.subr.mxu0 0.0
      %1121 = vmatpush2.msra.mxu0 %v693
      %1122 = vmatprep.subr.mxu0 0.0
      %1123 = vmatpush2.msra.mxu0 %v692
      %1124 = vmatprep.subr.mxu0 0.0
      %1125 = vmatpush2.msra.mxu0 %v691
      %1126 = vmatprep.subr.mxu0 0.0
      %1127 = vmatpush2.msra.mxu0 %v690
      %1128 = vmatprep.subr.mxu0 0.0
      %1129 = vmatpush2.msra.mxu0 %v689
      %1130 = vmatprep.subr.mxu0 0.0
      %1131 = vmatpush2.msra.mxu0 %v688
      %1132 = vmatprep.subr.mxu0 0.0
      %1133 = vmatpush2.msra.mxu0 %v687
      %1134 = vmatprep.subr.mxu0 0.0
      %1135 = vmatpush2.msra.mxu0 %v686
      %1136 = vmatprep.subr.mxu0 0.0
      %1137 = vmatpush2.msra.mxu0 %v685
      %1138 = vmatprep.subr.mxu0 0.0
      %1139 = vmatpush2.msra.mxu0 %v684
      %1140 = vmatprep.subr.mxu0 0.0
      %1141 = vmatpush2.msra.mxu0 %v683
      %1142 = vmatprep.subr.mxu0 0.0
      %1143 = vmatpush2.msra.mxu0 %v682
      %1144 = vmatprep.subr.mxu0 0.0
      %1145 = vmatpush2.msra.mxu0 %v681
      %1146 = vmatprep.mubr.f32.mxu0 %v524
      %1147 = vmatmul.mubr.f32.gmra.mxu0 %v439
      %v1148 = vpop.f32.mrf.mxu0
      %v1149 = vadd.f32 %v984, %v1148
      %v1150 = vpop.f32.mrf.mxu0
      %1151 = vmatprep.mubr.f32.mxu0 %v526
      %1152 = vmatmul.mubr.f32.gmra.mxu0 %v441
      %v1153 = vpop.f32.mrf.mxu0
      %v1154 = vadd.f32 %v989, %v1153
      %v1155 = vpop.f32.mrf.mxu0
      %1156 = vmatprep.mubr.f32.mxu0 %v529
      %1157 = vmatmul.mubr.f32.gmra.mxu0 %v444
      %v1158 = vpop.f32.mrf.mxu0
      %v1159 = vadd.f32 %v994, %v1158
      %v1160 = vpop.f32.mrf.mxu0
      %1161 = vmatprep.mubr.f32.mxu0 %v531
      %1162 = vmatmul.mubr.f32.gmra.mxu0 %v446
      %v1163 = vpop.f32.mrf.mxu0
      %v1164 = vadd.f32 %v999, %v1163
      %v1165 = vpop.f32.mrf.mxu0
      %1166 = vmatprep.mubr.f32.mxu0 %v534
      %1167 = vmatmul.mubr.f32.gmra.mxu0 %v449
      %v1168 = vpop.f32.mrf.mxu0
      %v1169 = vadd.f32 %v1004, %v1168
      %v1170 = vpop.f32.mrf.mxu0
      %1171 = vmatprep.mubr.f32.mxu0 %v536
      %1172 = vmatmul.mubr.f32.gmra.mxu0 %v451
      %v1173 = vpop.f32.mrf.mxu0
      %v1174 = vadd.f32 %v1009, %v1173
      %v1175 = vpop.f32.mrf.mxu0
      %1176 = vmatprep.mubr.f32.mxu0 %v539
      %1177 = vmatmul.mubr.f32.gmra.mxu0 %v454
      %v1178 = vpop.f32.mrf.mxu0
      %v1179 = vadd.f32 %v1014, %v1178
      %v1180 = vpop.f32.mrf.mxu0
      %1181 = vmatprep.mubr.f32.mxu0 %v541
      %1182 = vmatmul.mubr.f32.gmra.mxu0 %v456
      %v1183 = vpop.f32.mrf.mxu0
      %v1184 = vadd.f32 %v1019, %v1183
      %v1185 = vpop.f32.mrf.mxu0
      %1186 = vmatprep.mubr.f32.mxu0 %v544
      %1187 = vmatmul.mubr.f32.gmra.mxu0 %v459
      %v1188 = vpop.f32.mrf.mxu0
      %v1189 = vadd.f32 %v1024, %v1188
      %v1190 = vpop.f32.mrf.mxu0
      %1191 = vmatprep.mubr.f32.mxu0 %v546
      %1192 = vmatmul.mubr.f32.gmra.mxu0 %v461
      %v1193 = vpop.f32.mrf.mxu0
      %v1194 = vadd.f32 %v1029, %v1193
      %v1195 = vpop.f32.mrf.mxu0
      %1196 = vmatprep.mubr.f32.mxu0 %v549
      %1197 = vmatmul.mubr.f32.gmra.mxu0 %v464
      %v1198 = vpop.f32.mrf.mxu0
      %v1199 = vadd.f32 %v1034, %v1198
      %v1200 = vpop.f32.mrf.mxu0
      %1201 = vmatprep.mubr.f32.mxu0 %v551
      %1202 = vmatmul.mubr.f32.gmra.mxu0 %v466
      %v1203 = vpop.f32.mrf.mxu0
      %v1204 = vadd.f32 %v1039, %v1203
      %v1205 = vpop.f32.mrf.mxu0
      %1206 = vmatprep.mubr.f32.mxu0 %v554
      %1207 = vmatmul.mubr.f32.gmra.mxu0 %v469
      %v1208 = vpop.f32.mrf.mxu0
      %v1209 = vadd.f32 %v1044, %v1208
      %v1210 = vpop.f32.mrf.mxu0
      %1211 = vmatprep.mubr.f32.mxu0 %v556
      %1212 = vmatmul.mubr.f32.gmra.mxu0 %v471
      %v1213 = vpop.f32.mrf.mxu0
      %v1214 = vadd.f32 %v1049, %v1213
      %v1215 = vpop.f32.mrf.mxu0
      %1216 = vmatprep.mubr.f32.mxu0 %v559
      %1217 = vmatmul.mubr.f32.gmra.mxu0 %v474
      %v1218 = vpop.f32.mrf.mxu0
      %v1219 = vadd.f32 %v1054, %v1218
      %v1220 = vpop.f32.mrf.mxu0
      %1221 = vmatprep.mubr.f32.mxu0 %v561
      %1222 = vmatmul.mubr.f32.gmra.mxu0 %v476
      %v1223 = vpop.f32.mrf.mxu0
      %v1224 = vadd.f32 %v1059, %v1223
      %v1225 = vpop.f32.mrf.mxu0
      %1226 = vmatprep.mubr.f32.mxu0 %v564
      %1227 = vmatmul.mubr.f32.gmra.mxu0 %v479
      %v1228 = vpop.f32.mrf.mxu0
      %v1229 = vadd.f32 %v1064, %v1228
      %v1230 = vpop.f32.mrf.mxu0
      %1231 = vmatprep.mubr.f32.mxu0 %v566
      %1232 = vmatmul.mubr.f32.gmra.mxu0 %v481
      %v1233 = vpop.f32.mrf.mxu0
      %v1234 = vadd.f32 %v1069, %v1233
      %v1235 = vpop.f32.mrf.mxu0
      %1236 = vmatprep.mubr.f32.mxu0 %v569
      %1237 = vmatmul.mubr.f32.gmra.mxu0 %v484
      %v1238 = vpop.f32.mrf.mxu0
      %v1239 = vadd.f32 %v1074, %v1238
      %v1240 = vpop.f32.mrf.mxu0
      %1241 = vmatprep.mubr.f32.mxu0 %v571
      %1242 = vmatmul.mubr.f32.gmra.mxu0 %v486
      %v1243 = vpop.f32.mrf.mxu0
      %v1244 = vadd.f32 %v1079, %v1243
      %v1245 = vpop.f32.mrf.mxu0
      %1246 = vdwg.mxu0
      %1247 = vmatprep.subr.mxu0 0.0
      %1248 = vmatpush1.msra.mxu0 %v712
      %1249 = vmatprep.subr.mxu0 0.0
      %1250 = vmatpush1.msra.mxu0 %v711
      %1251 = vmatprep.subr.mxu0 0.0
      %1252 = vmatpush1.msra.mxu0 %v710
      %1253 = vmatprep.subr.mxu0 0.0
      %1254 = vmatpush1.msra.mxu0 %v709
      %1255 = vmatprep.subr.mxu0 0.0
      %1256 = vmatpush1.msra.mxu0 %v708
      %1257 = vmatprep.subr.mxu0 0.0
      %1258 = vmatpush1.msra.mxu0 %v707
      %1259 = vmatprep.subr.mxu0 0.0
      %1260 = vmatpush1.msra.mxu0 %v706
      %1261 = vmatprep.subr.mxu0 0.0
      %1262 = vmatpush1.msra.mxu0 %v705
      %1263 = vmatprep.subr.mxu0 0.0
      %1264 = vmatpush1.msra.mxu0 %v704
      %1265 = vmatprep.subr.mxu0 0.0
      %1266 = vmatpush1.msra.mxu0 %v703
      %1267 = vmatprep.subr.mxu0 0.0
      %1268 = vmatpush1.msra.mxu0 %v702
      %1269 = vmatprep.subr.mxu0 0.0
      %1270 = vmatpush1.msra.mxu0 %v701
      %1271 = vmatprep.subr.mxu0 0.0
      %1272 = vmatpush1.msra.mxu0 %v700
      %1273 = vmatprep.subr.mxu0 0.0
      %1274 = vmatpush1.msra.mxu0 %v699
      %1275 = vmatprep.subr.mxu0 0.0
      %1276 = vmatpush1.msra.mxu0 %v698
      %1277 = vmatprep.subr.mxu0 0.0
      %1278 = vmatpush1.msra.mxu0 %v697
      %1279 = vmatprep.subr.mxu0 0.0
      %1280 = vmatpush2.msra.mxu0 %v728
      %1281 = vmatprep.subr.mxu0 0.0
      %1282 = vmatpush2.msra.mxu0 %v727
      %1283 = vmatprep.subr.mxu0 0.0
      %1284 = vmatpush2.msra.mxu0 %v726
      %1285 = vmatprep.subr.mxu0 0.0
      %1286 = vmatpush2.msra.mxu0 %v725
      %1287 = vmatprep.subr.mxu0 0.0
      %1288 = vmatpush2.msra.mxu0 %v724
      %1289 = vmatprep.subr.mxu0 0.0
      %1290 = vmatpush2.msra.mxu0 %v723
      %1291 = vmatprep.subr.mxu0 0.0
      %1292 = vmatpush2.msra.mxu0 %v722
      %1293 = vmatprep.subr.mxu0 0.0
      %1294 = vmatpush2.msra.mxu0 %v721
      %1295 = vmatprep.subr.mxu0 0.0
      %1296 = vmatpush2.msra.mxu0 %v720
      %1297 = vmatprep.subr.mxu0 0.0
      %1298 = vmatpush2.msra.mxu0 %v719
      %1299 = vmatprep.subr.mxu0 0.0
      %1300 = vmatpush2.msra.mxu0 %v718
      %1301 = vmatprep.subr.mxu0 0.0
      %1302 = vmatpush2.msra.mxu0 %v717
      %1303 = vmatprep.subr.mxu0 0.0
      %1304 = vmatpush2.msra.mxu0 %v716
      %1305 = vmatprep.subr.mxu0 0.0
      %1306 = vmatpush2.msra.mxu0 %v715
      %1307 = vmatprep.subr.mxu0 0.0
      %1308 = vmatpush2.msra.mxu0 %v714
      %1309 = vmatprep.subr.mxu0 0.0
      %1310 = vmatpush2.msra.mxu0 %v713
      %1311 = vmatprep.mubr.f32.mxu0 %v444
      %1312 = vmatmul.mubr.f32.gmra.mxu0 %v365
      %v1313 = vpop.f32.mrf.mxu0
      %v1314 = vadd.f32 %v1149, %v1313
      %v1315 = vpop.f32.mrf.mxu0
      %1316 = vmatprep.mubr.f32.mxu0 %v446
      %1317 = vmatmul.mubr.f32.gmra.mxu0 %v366
      %v1318 = vpop.f32.mrf.mxu0
      %v1319 = vadd.f32 %v1154, %v1318
      %v1320 = vpop.f32.mrf.mxu0
      %1321 = vmatprep.mubr.f32.mxu0 %v449
      %1322 = vmatmul.mubr.f32.gmra.mxu0 %v368
      %v1323 = vpop.f32.mrf.mxu0
      %v1324 = vadd.f32 %v1159, %v1323
      %v1325 = vpop.f32.mrf.mxu0
      %1326 = vmatprep.mubr.f32.mxu0 %v451
      %1327 = vmatmul.mubr.f32.gmra.mxu0 %v369
      %v1328 = vpop.f32.mrf.mxu0
      %v1329 = vadd.f32 %v1164, %v1328
      %v1330 = vpop.f32.mrf.mxu0
      %1331 = vmatprep.mubr.f32.mxu0 %v454
      %1332 = vmatmul.mubr.f32.gmra.mxu0 %v371
      %v1333 = vpop.f32.mrf.mxu0
      %v1334 = vadd.f32 %v1169, %v1333
      %v1335 = vpop.f32.mrf.mxu0
      %1336 = vmatprep.mubr.f32.mxu0 %v456
      %1337 = vmatmul.mubr.f32.gmra.mxu0 %v372
      %v1338 = vpop.f32.mrf.mxu0
      %v1339 = vadd.f32 %v1174, %v1338
      %v1340 = vpop.f32.mrf.mxu0
      %1341 = vmatprep.mubr.f32.mxu0 %v459
      %1342 = vmatmul.mubr.f32.gmra.mxu0 %v374
      %v1343 = vpop.f32.mrf.mxu0
      %v1344 = vadd.f32 %v1179, %v1343
      %v1345 = vpop.f32.mrf.mxu0
      %1346 = vmatprep.mubr.f32.mxu0 %v461
      %1347 = vmatmul.mubr.f32.gmra.mxu0 %v375
      %v1348 = vpop.f32.mrf.mxu0
      %v1349 = vadd.f32 %v1184, %v1348
      %v1350 = vpop.f32.mrf.mxu0
      %1351 = vmatprep.mubr.f32.mxu0 %v464
      %1352 = vmatmul.mubr.f32.gmra.mxu0 %v377
      %v1353 = vpop.f32.mrf.mxu0
      %v1354 = vadd.f32 %v1189, %v1353
      %v1355 = vpop.f32.mrf.mxu0
      %1356 = vmatprep.mubr.f32.mxu0 %v466
      %1357 = vmatmul.mubr.f32.gmra.mxu0 %v378
      %v1358 = vpop.f32.mrf.mxu0
      %v1359 = vadd.f32 %v1194, %v1358
      %v1360 = vpop.f32.mrf.mxu0
      %1361 = vmatprep.mubr.f32.mxu0 %v469
      %1362 = vmatmul.mubr.f32.gmra.mxu0 %v380
      %v1363 = vpop.f32.mrf.mxu0
      %v1364 = vadd.f32 %v1199, %v1363
      %v1365 = vpop.f32.mrf.mxu0
      %1366 = vmatprep.mubr.f32.mxu0 %v471
      %1367 = vmatmul.mubr.f32.gmra.mxu0 %v381
      %v1368 = vpop.f32.mrf.mxu0
      %v1369 = vadd.f32 %v1204, %v1368
      %v1370 = vpop.f32.mrf.mxu0
      %1371 = vmatprep.mubr.f32.mxu0 %v474
      %1372 = vmatmul.mubr.f32.gmra.mxu0 %v383
      %v1373 = vpop.f32.mrf.mxu0
      %v1374 = vadd.f32 %v1209, %v1373
      %v1375 = vpop.f32.mrf.mxu0
      %1376 = vmatprep.mubr.f32.mxu0 %v476
      %1377 = vmatmul.mubr.f32.gmra.mxu0 %v384
      %v1378 = vpop.f32.mrf.mxu0
      %v1379 = vadd.f32 %v1214, %v1378
      %v1380 = vpop.f32.mrf.mxu0
      %1381 = vmatprep.mubr.f32.mxu0 %v479
      %1382 = vmatmul.mubr.f32.gmra.mxu0 %v386
      %v1383 = vpop.f32.mrf.mxu0
      %v1384 = vadd.f32 %v1219, %v1383
      %v1385 = vpop.f32.mrf.mxu0
      %1386 = vmatprep.mubr.f32.mxu0 %v481
      %1387 = vmatmul.mubr.f32.gmra.mxu0 %v387
      %v1388 = vpop.f32.mrf.mxu0
      %v1389 = vadd.f32 %v1224, %v1388
      %v1390 = vpop.f32.mrf.mxu0
      %1391 = vmatprep.mubr.f32.mxu0 %v484
      %1392 = vmatmul.mubr.f32.gmra.mxu0 %v389
      %v1393 = vpop.f32.mrf.mxu0
      %v1394 = vadd.f32 %v1229, %v1393
      %v1395 = vpop.f32.mrf.mxu0
      %1396 = vmatprep.mubr.f32.mxu0 %v486
      %1397 = vmatmul.mubr.f32.gmra.mxu0 %v390
      %v1398 = vpop.f32.mrf.mxu0
      %v1399 = vadd.f32 %v1234, %v1398
      %v1400 = vpop.f32.mrf.mxu0
      %1401 = vmatprep.mubr.f32.mxu0 %v489
      %1402 = vmatmul.mubr.f32.gmra.mxu0 %v392
      %v1403 = vpop.f32.mrf.mxu0
      %v1404 = vadd.f32 %v1239, %v1403
      %v1405 = vpop.f32.mrf.mxu0
      %1406 = vmatprep.mubr.f32.mxu0 %v491
      %1407 = vmatmul.mubr.f32.gmra.mxu0 %v393
      %v1408 = vpop.f32.mrf.mxu0
      %v1409 = vadd.f32 %v1244, %v1408
      %v1410 = vpop.f32.mrf.mxu0
      %1411 = vdwg.mxu0
      %1412 = vmatprep.subr.mxu0 0.0
      %1413 = vmatpush1.msra.mxu0 %v744
      %1414 = vmatprep.subr.mxu0 0.0
      %1415 = vmatpush1.msra.mxu0 %v743
      %1416 = vmatprep.subr.mxu0 0.0
      %1417 = vmatpush1.msra.mxu0 %v742
      %1418 = vmatprep.subr.mxu0 0.0
      %1419 = vmatpush1.msra.mxu0 %v741
      %1420 = vmatprep.subr.mxu0 0.0
      %1421 = vmatpush1.msra.mxu0 %v740
      %1422 = vmatprep.subr.mxu0 0.0
      %1423 = vmatpush1.msra.mxu0 %v739
      %1424 = vmatprep.subr.mxu0 0.0
      %1425 = vmatpush1.msra.mxu0 %v738
      %1426 = vmatprep.subr.mxu0 0.0
      %1427 = vmatpush1.msra.mxu0 %v737
      %1428 = vmatprep.subr.mxu0 0.0
      %1429 = vmatpush1.msra.mxu0 %v736
      %1430 = vmatprep.subr.mxu0 0.0
      %1431 = vmatpush1.msra.mxu0 %v735
      %1432 = vmatprep.subr.mxu0 0.0
      %1433 = vmatpush1.msra.mxu0 %v734
      %1434 = vmatprep.subr.mxu0 0.0
      %1435 = vmatpush1.msra.mxu0 %v733
      %1436 = vmatprep.subr.mxu0 0.0
      %1437 = vmatpush1.msra.mxu0 %v732
      %1438 = vmatprep.subr.mxu0 0.0
      %1439 = vmatpush1.msra.mxu0 %v731
      %1440 = vmatprep.subr.mxu0 0.0
      %1441 = vmatpush1.msra.mxu0 %v730
      %1442 = vmatprep.subr.mxu0 0.0
      %1443 = vmatpush1.msra.mxu0 %v729
      %1444 = vmatprep.subr.mxu0 0.0
      %1445 = vmatpush2.msra.mxu0 0.0
      %1446 = vmatprep.subr.mxu0 0.0
      %1447 = vmatpush2.msra.mxu0 0.0
      %1448 = vmatprep.subr.mxu0 0.0
      %1449 = vmatpush2.msra.mxu0 0.0
      %1450 = vmatprep.subr.mxu0 0.0
      %1451 = vmatpush2.msra.mxu0 0.0
      %1452 = vmatprep.subr.mxu0 0.0
      %1453 = vmatpush2.msra.mxu0 0.0
      %1454 = vmatprep.subr.mxu0 0.0
      %1455 = vmatpush2.msra.mxu0 0.0
      %1456 = vmatprep.subr.mxu0 0.0
      %1457 = vmatpush2.msra.mxu0 0.0
      %1458 = vmatprep.subr.mxu0 0.0
      %1459 = vmatpush2.msra.mxu0 0.0
      %1460 = vmatprep.subr.mxu0 0.0
      %1461 = vmatpush2.msra.mxu0 0.0
      %1462 = vmatprep.subr.mxu0 0.0
      %1463 = vmatpush2.msra.mxu0 0.0
      %1464 = vmatprep.subr.mxu0 0.0
      %1465 = vmatpush2.msra.mxu0 0.0
      %1466 = vmatprep.subr.mxu0 0.0
      %1467 = vmatpush2.msra.mxu0 0.0
      %1468 = vmatprep.subr.mxu0 0.0
      %1469 = vmatpush2.msra.mxu0 0.0
      %1470 = vmatprep.subr.mxu0 0.0
      %1471 = vmatpush2.msra.mxu0 0.0
      %1472 = vmatprep.subr.mxu0 0.0
      %1473 = vmatpush2.msra.mxu0 0.0
      %1474 = vmatprep.subr.mxu0 0.0
      %1475 = vmatpush2.msra.mxu0 0.0
      %1476 = vmatprep.mubr.f32.mxu0 0.0
      %1477 = vmatmul.mubr.f32.gmra.mxu0 %v529
      %v1478 = vpop.f32.mrf.mxu0
      %v1479 = vadd.f32 %v1314, %v1478
      %v1480 = vpop.f32.mrf.mxu0
      %1481 = vmatprep.mubr.f32.mxu0 0.0
      %1482 = vmatmul.mubr.f32.gmra.mxu0 %v531
      %v1483 = vpop.f32.mrf.mxu0
      %v1484 = vadd.f32 %v1319, %v1483
      %v1485 = vpop.f32.mrf.mxu0
      %1486 = vmatprep.mubr.f32.mxu0 0.0
      %1487 = vmatmul.mubr.f32.gmra.mxu0 %v534
      %v1488 = vpop.f32.mrf.mxu0
      %v1489 = vadd.f32 %v1324, %v1488
      %v1490 = vpop.f32.mrf.mxu0
      %1491 = vmatprep.mubr.f32.mxu0 0.0
      %1492 = vmatmul.mubr.f32.gmra.mxu0 %v536
      %v1493 = vpop.f32.mrf.mxu0
      %v1494 = vadd.f32 %v1329, %v1493
      %v1495 = vpop.f32.mrf.mxu0
      %1496 = vmatprep.mubr.f32.mxu0 0.0
      %1497 = vmatmul.mubr.f32.gmra.mxu0 %v539
      %v1498 = vpop.f32.mrf.mxu0
      %v1499 = vadd.f32 %v1334, %v1498
      %v1500 = vpop.f32.mrf.mxu0
      %1501 = vmatprep.mubr.f32.mxu0 0.0
      %1502 = vmatmul.mubr.f32.gmra.mxu0 %v541
      %v1503 = vpop.f32.mrf.mxu0
      %v1504 = vadd.f32 %v1339, %v1503
      %v1505 = vpop.f32.mrf.mxu0
      %1506 = vmatprep.mubr.f32.mxu0 0.0
      %1507 = vmatmul.mubr.f32.gmra.mxu0 %v544
      %v1508 = vpop.f32.mrf.mxu0
      %v1509 = vadd.f32 %v1344, %v1508
      %v1510 = vpop.f32.mrf.mxu0
      %1511 = vmatprep.mubr.f32.mxu0 0.0
      %1512 = vmatmul.mubr.f32.gmra.mxu0 %v546
      %v1513 = vpop.f32.mrf.mxu0
      %v1514 = vadd.f32 %v1349, %v1513
      %v1515 = vpop.f32.mrf.mxu0
      %1516 = vmatprep.mubr.f32.mxu0 0.0
      %1517 = vmatmul.mubr.f32.gmra.mxu0 %v549
      %v1518 = vpop.f32.mrf.mxu0
      %v1519 = vadd.f32 %v1354, %v1518
      %v1520 = vpop.f32.mrf.mxu0
      %1521 = vmatprep.mubr.f32.mxu0 0.0
      %1522 = vmatmul.mubr.f32.gmra.mxu0 %v551
      %v1523 = vpop.f32.mrf.mxu0
      %v1524 = vadd.f32 %v1359, %v1523
      %v1525 = vpop.f32.mrf.mxu0
      %1526 = vmatprep.mubr.f32.mxu0 0.0
      %1527 = vmatmul.mubr.f32.gmra.mxu0 %v554
      %v1528 = vpop.f32.mrf.mxu0
      %v1529 = vadd.f32 %v1364, %v1528
      %v1530 = vpop.f32.mrf.mxu0
      %1531 = vmatprep.mubr.f32.mxu0 0.0
      %1532 = vmatmul.mubr.f32.gmra.mxu0 %v556
      %v1533 = vpop.f32.mrf.mxu0
      %v1534 = vadd.f32 %v1369, %v1533
      %v1535 = vpop.f32.mrf.mxu0
      %1536 = vmatprep.mubr.f32.mxu0 0.0
      %1537 = vmatmul.mubr.f32.gmra.mxu0 %v559
      %v1538 = vpop.f32.mrf.mxu0
      %v1539 = vadd.f32 %v1374, %v1538
      %v1540 = vpop.f32.mrf.mxu0
      %1541 = vmatprep.mubr.f32.mxu0 0.0
      %1542 = vmatmul.mubr.f32.gmra.mxu0 %v561
      %v1543 = vpop.f32.mrf.mxu0
      %v1544 = vadd.f32 %v1379, %v1543
      %v1545 = vpop.f32.mrf.mxu0
      %1546 = vmatprep.mubr.f32.mxu0 0.0
      %1547 = vmatmul.mubr.f32.gmra.mxu0 %v564
      %v1548 = vpop.f32.mrf.mxu0
      %v1549 = vadd.f32 %v1384, %v1548
      %v1550 = vpop.f32.mrf.mxu0
      %1551 = vmatprep.mubr.f32.mxu0 0.0
      %1552 = vmatmul.mubr.f32.gmra.mxu0 %v566
      %v1553 = vpop.f32.mrf.mxu0
      %v1554 = vadd.f32 %v1389, %v1553
      %v1555 = vpop.f32.mrf.mxu0
      %1556 = vmatprep.mubr.f32.mxu0 0.0
      %1557 = vmatmul.mubr.f32.gmra.mxu0 %v569
      %v1558 = vpop.f32.mrf.mxu0
      %v1559 = vadd.f32 %v1394, %v1558
      %v1560 = vpop.f32.mrf.mxu0
      %1561 = vmatprep.mubr.f32.mxu0 0.0
      %1562 = vmatmul.mubr.f32.gmra.mxu0 %v571
      %v1563 = vpop.f32.mrf.mxu0
      %v1564 = vadd.f32 %v1399, %v1563
      %v1565 = vpop.f32.mrf.mxu0
      %1566 = vmatprep.mubr.f32.mxu0 0.0
      %1567 = vmatmul.mubr.f32.gmra.mxu0 %v574
      %v1568 = vpop.f32.mrf.mxu0
      %v1569 = vadd.f32 %v1404, %v1568
      %v1570 = vpop.f32.mrf.mxu0
      %1571 = vmatprep.mubr.f32.mxu0 0.0
      %1572 = vmatmul.mubr.f32.gmra.mxu0 %v576
      %v1573 = vpop.f32.mrf.mxu0
      %v1574 = vadd.f32 %v1409, %v1573
      %v1575 = vpop.f32.mrf.mxu0
      %1576 = vdwg.mxu0
      %v1577 = vmax.f32 %v1479, 0.0
      %v1578 = vmax.f32 %v1484, 0.0
      %v1579 = vmax.f32 %v1489, 0.0
      %v1580 = vmax.f32 %v1494, 0.0
      %v1581 = vmax.f32 %v1499, 0.0
      %v1582 = vmax.f32 %v1504, 0.0
      %v1583 = vmax.f32 %v1509, 0.0
      %v1584 = vmax.f32 %v1514, 0.0
      %v1585 = vmax.f32 %v1519, 0.0
      %v1586 = vmax.f32 %v1524, 0.0
      %v1587 = vmax.f32 %v1529, 0.0
      %v1588 = vmax.f32 %v1534, 0.0
      %v1589 = vmax.f32 %v1539, 0.0
      %v1590 = vmax.f32 %v1544, 0.0
      %v1591 = vmax.f32 %v1549, 0.0
      %v1592 = vmax.f32 %v1554, 0.0
      %v1593 = vmax.f32 %v1559, 0.0
      %v1594 = vmax.f32 %v1564, 0.0
      %v1595 = vmax.f32 %v1569, 0.0
      %v1596 = vmax.f32 %v1574, 0.0
      %s1597 = ssub.s32 %s205, 1
      %v1598 = vstv %s1597
      %v1599 = vadd.s32 %v1598, 1
      %v1600 = vadd.s32 %v1598, 2
      %v1601 = vadd.s32 %v1598, 3
      %v1602 = vadd.s32 %v1598, 4
      %v1603 = vadd.s32 %v1598, 5
      %v1604 = vadd.s32 %v1598, 6
      %v1605 = vadd.s32 %v1598, 7
      %v1606 = vadd.s32 %v1598, 8
      %v1607 = vadd.s32 %v1598, 9
      %vm1608 = vcmp.ge.s32.totalorder %v1598, 0
      %vm1609 = vcmp.ge.s32.totalorder %v1599, 0
      %vm1610 = vcmp.ge.s32.totalorder %v1600, 0
      %vm1611 = vcmp.ge.s32.totalorder %v1601, 0
      %vm1612 = vcmp.ge.s32.totalorder %v1602, 0
      %vm1613 = vcmp.ge.s32.totalorder %v1603, 0
      %vm1614 = vcmp.ge.s32.totalorder %v1604, 0
      %vm1615 = vcmp.ge.s32.totalorder %v1605, 0
      %vm1616 = vcmp.ge.s32.totalorder %v1606, 0
      %vm1617 = vcmp.ge.s32.totalorder %v1607, 0
      %vm1618 = vcmp.lt.s32.totalorder %v1598, 16
      %vm1619 = vcmp.lt.s32.totalorder %v1599, 16
      %vm1620 = vcmp.lt.s32.totalorder %v1600, 16
      %vm1621 = vcmp.lt.s32.totalorder %v1601, 16
      %vm1622 = vcmp.lt.s32.totalorder %v1602, 16
      %vm1623 = vcmp.lt.s32.totalorder %v1603, 16
      %vm1624 = vcmp.lt.s32.totalorder %v1604, 16
      %vm1625 = vcmp.lt.s32.totalorder %v1605, 16
      %vm1626 = vcmp.lt.s32.totalorder %v1606, 16
      %vm1627 = vcmp.lt.s32.totalorder %v1607, 16
      %vm1628 = vmand %vm1608, %vm1618
      %vm1629 = vmand %vm1609, %vm1619
      %vm1630 = vmand %vm1610, %vm1620
      %vm1631 = vmand %vm1611, %vm1621
      %vm1632 = vmand %vm1612, %vm1622
      %vm1633 = vmand %vm1613, %vm1623
      %vm1634 = vmand %vm1614, %vm1624
      %vm1635 = vmand %vm1615, %vm1625
      %vm1636 = vmand %vm1616, %vm1626
      %vm1637 = vmand %vm1617, %vm1627
      %v1638 = vsel %vm1628, %v1577, 0.0
      %v1639 = vsel %vm1628, %v1578, 0.0
      %v1640 = vsel %vm1629, %v1579, 0.0
      %v1641 = vsel %vm1629, %v1580, 0.0
      %v1642 = vsel %vm1630, %v1581, 0.0
      %v1643 = vsel %vm1630, %v1582, 0.0
      %v1644 = vsel %vm1631, %v1583, 0.0
      %v1645 = vsel %vm1631, %v1584, 0.0
      %v1646 = vsel %vm1632, %v1585, 0.0
      %v1647 = vsel %vm1632, %v1586, 0.0
      %v1648 = vsel %vm1633, %v1587, 0.0
      %v1649 = vsel %vm1633, %v1588, 0.0
      %v1650 = vsel %vm1634, %v1589, 0.0
      %v1651 = vsel %vm1634, %v1590, 0.0
      %v1652 = vsel %vm1635, %v1591, 0.0
      %v1653 = vsel %vm1635, %v1592, 0.0
      %v1654 = vsel %vm1636, %v1593, 0.0
      %v1655 = vsel %vm1636, %v1594, 0.0
      %v1656 = vsel %vm1637, %v1595, 0.0
      %v1657 = vsel %vm1637, %v1596, 0.0
      %1658 = vst [vmem:[#allocation3] sm:$0x1] 0.0
      %1659 = vst [vmem:[#allocation3 + $0x18] sm:$0x1] 0.0
      %1660 = vst [vmem:[#allocation3 + $0x30] sm:$0x1] 0.0
      %1661 = vst [vmem:[#allocation3 + $0x48] sm:$0x1] 0.0
      %1662 = vst [vmem:[#allocation3 + $0x60] sm:$0x1] 0.0
      %1663 = vst [vmem:[#allocation3 + $0x78] sm:$0x1] 0.0
      %1664 = vst [vmem:[#allocation3 + $0x90] sm:$0x1] 0.0
      %1665 = vst [vmem:[#allocation3 + $0xa8] sm:$0x1] 0.0
      %1666 = vst [vmem:[#allocation3 + $0xc0] sm:$0x1] 0.0
      %1667 = vst [vmem:[#allocation3 + $0xd8] sm:$0x1] 0.0
      %1668 = vst [vmem:[#allocation3 + $0x11] sm:$0x1] 0.0
      %1669 = vst [vmem:[#allocation3 + $0x29] sm:$0x1] 0.0
      %1670 = vst [vmem:[#allocation3 + $0x41] sm:$0x1] 0.0
      %1671 = vst [vmem:[#allocation3 + $0x59] sm:$0x1] 0.0
      %1672 = vst [vmem:[#allocation3 + $0x71] sm:$0x1] 0.0
      %1673 = vst [vmem:[#allocation3 + $0x89] sm:$0x1] 0.0
      %1674 = vst [vmem:[#allocation3 + $0xa1] sm:$0x1] 0.0
      %1675 = vst [vmem:[#allocation3 + $0xb9] sm:$0x1] 0.0
      %1676 = vst [vmem:[#allocation3 + $0xd1] sm:$0x1] 0.0
      %1677 = vst [vmem:[#allocation3 + $0xe9] sm:$0x1] 0.0
      %1678 = vst [vmem:[#allocation3 + $0x1] sm:$0xff] %v1638
      %1679 = vst [vmem:[#allocation3 + $0x9] sm:$0xff] %v1639
      %1680 = vst [vmem:[#allocation3 + $0x19] sm:$0xff] %v1640
      %1681 = vst [vmem:[#allocation3 + $0x21] sm:$0xff] %v1641
      %1682 = vst [vmem:[#allocation3 + $0x31] sm:$0xff] %v1642
      %1683 = vst [vmem:[#allocation3 + $0x39] sm:$0xff] %v1643
      %1684 = vst [vmem:[#allocation3 + $0x49] sm:$0xff] %v1644
      %1685 = vst [vmem:[#allocation3 + $0x51] sm:$0xff] %v1645
      %1686 = vst [vmem:[#allocation3 + $0x61] sm:$0xff] %v1646
      %1687 = vst [vmem:[#allocation3 + $0x69] sm:$0xff] %v1647
      %1688 = vst [vmem:[#allocation3 + $0x79] sm:$0xff] %v1648
      %1689 = vst [vmem:[#allocation3 + $0x81] sm:$0xff] %v1649
      %1690 = vst [vmem:[#allocation3 + $0x91] sm:$0xff] %v1650
      %1691 = vst [vmem:[#allocation3 + $0x99] sm:$0xff] %v1651
      %1692 = vst [vmem:[#allocation3 + $0xa9] sm:$0xff] %v1652
      %1693 = vst [vmem:[#allocation3 + $0xb1] sm:$0xff] %v1653
      %1694 = vst [vmem:[#allocation3 + $0xc1] sm:$0xff] %v1654
      %1695 = vst [vmem:[#allocation3 + $0xc9] sm:$0xff] %v1655
      %1696 = vst [vmem:[#allocation3 + $0xd9] sm:$0xff] %v1656
      %1697 = vst [vmem:[#allocation3 + $0xe1] sm:$0xff] %v1657
      %v1698 = vld [vmem:[#allocation3] sm:$0xff]
      %v1699 = vld [vmem:[#allocation3 + $0x8] sm:$0xff]
      %v1700 = vld [vmem:[#allocation3 + $0x10] sm:$0x3]
      %v1701 = vld [vmem:[#allocation3 + $0x18] sm:$0xff]
      %v1702 = vld [vmem:[#allocation3 + $0x20] sm:$0xff]
      %v1703 = vld [vmem:[#allocation3 + $0x28] sm:$0x3]
      %v1704 = vld [vmem:[#allocation3 + $0x30] sm:$0xff]
      %v1705 = vld [vmem:[#allocation3 + $0x38] sm:$0xff]
      %v1706 = vld [vmem:[#allocation3 + $0x40] sm:$0x3]
      %v1707 = vld [vmem:[#allocation3 + $0x48] sm:$0xff]
      %v1708 = vld [vmem:[#allocation3 + $0x50] sm:$0xff]
      %v1709 = vld [vmem:[#allocation3 + $0x58] sm:$0x3]
      %v1710 = vld [vmem:[#allocation3 + $0x60] sm:$0xff]
      %v1711 = vld [vmem:[#allocation3 + $0x68] sm:$0xff]
      %v1712 = vld [vmem:[#allocation3 + $0x70] sm:$0x3]
      %v1713 = vld [vmem:[#allocation3 + $0x78] sm:$0xff]
      %v1714 = vld [vmem:[#allocation3 + $0x80] sm:$0xff]
      %v1715 = vld [vmem:[#allocation3 + $0x88] sm:$0x3]
      %v1716 = vld [vmem:[#allocation3 + $0x90] sm:$0xff]
      %v1717 = vld [vmem:[#allocation3 + $0x98] sm:$0xff]
      %v1718 = vld [vmem:[#allocation3 + $0xa0] sm:$0x3]
      %v1719 = vld [vmem:[#allocation3 + $0xa8] sm:$0xff]
      %v1720 = vld [vmem:[#allocation3 + $0xb0] sm:$0xff]
      %v1721 = vld [vmem:[#allocation3 + $0xb8] sm:$0x3]
      %v1722 = vld [vmem:[#allocation3 + $0xc0] sm:$0xff]
      %v1723 = vld [vmem:[#allocation3 + $0xc8] sm:$0xff]
      %v1724 = vld [vmem:[#allocation3 + $0xd0] sm:$0x3]
      %v1725 = vld [vmem:[#allocation3 + $0xd8] sm:$0xff]
      %v1726 = vld [vmem:[#allocation3 + $0xe0] sm:$0xff]
      %v1727 = vld [vmem:[#allocation3 + $0xe8] sm:$0x3]
      %v1758 = vrot.slane %v1698, 1
      %v1759 = vrot.slane %v1699, 1
      %v1760 = vsel %vm431, %v1758, %v1759
      %v1761 = vrot.slane %v1700, 1
      %v1762 = vsel %vm431, %v1759, %v1761
      %v1763 = vrot.slane %v1701, 1
      %v1764 = vrot.slane %v1702, 1
      %v1765 = vsel %vm431, %v1763, %v1764
      %v1766 = vrot.slane %v1703, 1
      %v1767 = vsel %vm431, %v1764, %v1766
      %v1768 = vrot.slane %v1704, 1
      %v1769 = vrot.slane %v1705, 1
      %v1770 = vsel %vm431, %v1768, %v1769
      %v1771 = vrot.slane %v1706, 1
      %v1772 = vsel %vm431, %v1769, %v1771
      %v1773 = vrot.slane %v1707, 1
      %v1774 = vrot.slane %v1708, 1
      %v1775 = vsel %vm431, %v1773, %v1774
      %v1776 = vrot.slane %v1709, 1
      %v1777 = vsel %vm431, %v1774, %v1776
      %v1778 = vrot.slane %v1710, 1
      %v1779 = vrot.slane %v1711, 1
      %v1780 = vsel %vm431, %v1778, %v1779
      %v1781 = vrot.slane %v1712, 1
      %v1782 = vsel %vm431, %v1779, %v1781
      %v1783 = vrot.slane %v1713, 1
      %v1784 = vrot.slane %v1714, 1
      %v1785 = vsel %vm431, %v1783, %v1784
      %v1786 = vrot.slane %v1715, 1
      %v1787 = vsel %vm431, %v1784, %v1786
      %v1788 = vrot.slane %v1716, 1
      %v1789 = vrot.slane %v1717, 1
      %v1790 = vsel %vm431, %v1788, %v1789
      %v1791 = vrot.slane %v1718, 1
      %v1792 = vsel %vm431, %v1789, %v1791
      %v1793 = vrot.slane %v1719, 1
      %v1794 = vrot.slane %v1720, 1
      %v1795 = vsel %vm431, %v1793, %v1794
      %v1796 = vrot.slane %v1721, 1
      %v1797 = vsel %vm431, %v1794, %v1796
      %v1798 = vrot.slane %v1722, 1
      %v1799 = vrot.slane %v1723, 1
      %v1800 = vsel %vm431, %v1798, %v1799
      %v1801 = vrot.slane %v1724, 1
      %v1802 = vsel %vm431, %v1799, %v1801
      %v1803 = vrot.slane %v1725, 1
      %v1804 = vrot.slane %v1726, 1
      %v1805 = vsel %vm431, %v1803, %v1804
      %v1806 = vrot.slane %v1727, 1
      %v1807 = vsel %vm431, %v1804, %v1806
      %v1828 = vrot.slane %v1698, 2
      %v1829 = vrot.slane %v1699, 2
      %v1830 = vsel %vm516, %v1828, %v1829
      %v1831 = vrot.slane %v1700, 2
      %v1832 = vsel %vm516, %v1829, %v1831
      %v1833 = vrot.slane %v1701, 2
      %v1834 = vrot.slane %v1702, 2
      %v1835 = vsel %vm516, %v1833, %v1834
      %v1836 = vrot.slane %v1703, 2
      %v1837 = vsel %vm516, %v1834, %v1836
      %v1838 = vrot.slane %v1704, 2
      %v1839 = vrot.slane %v1705, 2
      %v1840 = vsel %vm516, %v1838, %v1839
      %v1841 = vrot.slane %v1706, 2
      %v1842 = vsel %vm516, %v1839, %v1841
      %v1843 = vrot.slane %v1707, 2
      %v1844 = vrot.slane %v1708, 2
      %v1845 = vsel %vm516, %v1843, %v1844
      %v1846 = vrot.slane %v1709, 2
      %v1847 = vsel %vm516, %v1844, %v1846
      %v1848 = vrot.slane %v1710, 2
      %v1849 = vrot.slane %v1711, 2
      %v1850 = vsel %vm516, %v1848, %v1849
      %v1851 = vrot.slane %v1712, 2
      %v1852 = vsel %vm516, %v1849, %v1851
      %v1853 = vrot.slane %v1713, 2
      %v1854 = vrot.slane %v1714, 2
      %v1855 = vsel %vm516, %v1853, %v1854
      %v1856 = vrot.slane %v1715, 2
      %v1857 = vsel %vm516, %v1854, %v1856
      %v1858 = vrot.slane %v1716, 2
      %v1859 = vrot.slane %v1717, 2
      %v1860 = vsel %vm516, %v1858, %v1859
      %v1861 = vrot.slane %v1718, 2
      %v1862 = vsel %vm516, %v1859, %v1861
      %v1863 = vrot.slane %v1719, 2
      %v1864 = vrot.slane %v1720, 2
      %v1865 = vsel %vm516, %v1863, %v1864
      %v1866 = vrot.slane %v1721, 2
      %v1867 = vsel %vm516, %v1864, %v1866
      %v1868 = vrot.slane %v1722, 2
      %v1869 = vrot.slane %v1723, 2
      %v1870 = vsel %vm516, %v1868, %v1869
      %v1871 = vrot.slane %v1724, 2
      %v1872 = vsel %vm516, %v1869, %v1871
      %v1873 = vrot.slane %v1725, 2
      %v1874 = vrot.slane %v1726, 2
      %v1875 = vsel %vm516, %v1873, %v1874
      %v1876 = vrot.slane %v1727, 2
      %v1877 = vsel %vm516, %v1874, %v1876
      %v1898 = vld [vmem:[%s3] sm:$0xff]
      %v1899 = vld [vmem:[%s3 + $0x8] sm:$0xff]
      %v1900 = vld [vmem:[%s3 + $0x10] sm:$0xff]
      %v1901 = vld [vmem:[%s3 + $0x18] sm:$0xff]
      %v1902 = vld [vmem:[%s3 + $0x20] sm:$0xff]
      %v1903 = vld [vmem:[%s3 + $0x28] sm:$0xff]
      %v1904 = vld [vmem:[%s3 + $0x30] sm:$0xff]
      %v1905 = vld [vmem:[%s3 + $0x38] sm:$0xff]
      %v1906 = vld [vmem:[%s3 + $0x40] sm:$0xff]
      %v1907 = vld [vmem:[%s3 + $0x48] sm:$0xff]
      %v1908 = vld [vmem:[%s3 + $0x50] sm:$0xff]
      %v1909 = vld [vmem:[%s3 + $0x58] sm:$0xff]
      %v1910 = vld [vmem:[%s3 + $0x60] sm:$0xff]
      %v1911 = vld [vmem:[%s3 + $0x68] sm:$0xff]
      %v1912 = vld [vmem:[%s3 + $0x70] sm:$0xff]
      %v1913 = vld [vmem:[%s3 + $0x78] sm:$0xff]
      %v1914 = vld [vmem:[%s3 + $0x80] sm:$0xff]
      %v1915 = vld [vmem:[%s3 + $0x88] sm:$0xff]
      %v1916 = vld [vmem:[%s3 + $0x90] sm:$0xff]
      %v1917 = vld [vmem:[%s3 + $0x98] sm:$0xff]
      %v1918 = vld [vmem:[%s3 + $0xa0] sm:$0xff]
      %v1919 = vld [vmem:[%s3 + $0xa8] sm:$0xff]
      %v1920 = vld [vmem:[%s3 + $0xb0] sm:$0xff]
      %v1921 = vld [vmem:[%s3 + $0xb8] sm:$0xff]
      %v1922 = vld [vmem:[%s3 + $0xc0] sm:$0xff]
      %v1923 = vld [vmem:[%s3 + $0xc8] sm:$0xff]
      %v1924 = vld [vmem:[%s3 + $0xd0] sm:$0xff]
      %v1925 = vld [vmem:[%s3 + $0xd8] sm:$0xff]
      %v1926 = vld [vmem:[%s3 + $0xe0] sm:$0xff]
      %v1927 = vld [vmem:[%s3 + $0xe8] sm:$0xff]
      %v1928 = vld [vmem:[%s3 + $0xf0] sm:$0xff]
      %v1929 = vld [vmem:[%s3 + $0xf8] sm:$0xff]
      %v1930 = vld [vmem:[%s3 + $0x100] sm:$0xff]
      %v1931 = vld [vmem:[%s3 + $0x108] sm:$0xff]
      %v1932 = vld [vmem:[%s3 + $0x110] sm:$0xff]
      %v1933 = vld [vmem:[%s3 + $0x118] sm:$0xff]
      %v1934 = vld [vmem:[%s3 + $0x120] sm:$0xff]
      %v1935 = vld [vmem:[%s3 + $0x128] sm:$0xff]
      %v1936 = vld [vmem:[%s3 + $0x130] sm:$0xff]
      %v1937 = vld [vmem:[%s3 + $0x138] sm:$0xff]
      %v1938 = vld [vmem:[%s3 + $0x140] sm:$0xff]
      %v1939 = vld [vmem:[%s3 + $0x148] sm:$0xff]
      %v1940 = vld [vmem:[%s3 + $0x150] sm:$0xff]
      %v1941 = vld [vmem:[%s3 + $0x158] sm:$0xff]
      %v1942 = vld [vmem:[%s3 + $0x160] sm:$0xff]
      %v1943 = vld [vmem:[%s3 + $0x168] sm:$0xff]
      %v1944 = vld [vmem:[%s3 + $0x170] sm:$0xff]
      %v1945 = vld [vmem:[%s3 + $0x178] sm:$0xff]
      %v1946 = vld [vmem:[%s3 + $0x180] sm:$0xff]
      %v1947 = vld [vmem:[%s3 + $0x188] sm:$0xff]
      %v1948 = vld [vmem:[%s3 + $0x190] sm:$0xff]
      %v1949 = vld [vmem:[%s3 + $0x198] sm:$0xff]
      %v1950 = vld [vmem:[%s3 + $0x1a0] sm:$0xff]
      %v1951 = vld [vmem:[%s3 + $0x1a8] sm:$0xff]
      %v1952 = vld [vmem:[%s3 + $0x1b0] sm:$0xff]
      %v1953 = vld [vmem:[%s3 + $0x1b8] sm:$0xff]
      %v1954 = vld [vmem:[%s3 + $0x1c0] sm:$0xff]
      %v1955 = vld [vmem:[%s3 + $0x1c8] sm:$0xff]
      %v1956 = vld [vmem:[%s3 + $0x1d0] sm:$0xff]
      %v1957 = vld [vmem:[%s3 + $0x1d8] sm:$0xff]
      %v1958 = vld [vmem:[%s3 + $0x1e0] sm:$0xff]
      %v1959 = vld [vmem:[%s3 + $0x1e8] sm:$0xff]
      %v1960 = vld [vmem:[%s3 + $0x1f0] sm:$0xff]
      %v1961 = vld [vmem:[%s3 + $0x1f8] sm:$0xff]
      %v1962 = vld [vmem:[%s3 + $0x200] sm:$0xff]
      %v1963 = vld [vmem:[%s3 + $0x208] sm:$0xff]
      %v1964 = vld [vmem:[%s3 + $0x210] sm:$0xff]
      %v1965 = vld [vmem:[%s3 + $0x218] sm:$0xff]
      %v1966 = vld [vmem:[%s3 + $0x220] sm:$0xff]
      %v1967 = vld [vmem:[%s3 + $0x228] sm:$0xff]
      %v1968 = vld [vmem:[%s3 + $0x230] sm:$0xff]
      %v1969 = vld [vmem:[%s3 + $0x238] sm:$0xff]
      %v1970 = vld [vmem:[%s3 + $0x240] sm:$0xff]
      %v1971 = vld [vmem:[%s3 + $0x248] sm:$0xff]
      %v1972 = vld [vmem:[%s3 + $0x250] sm:$0xff]
      %v1973 = vld [vmem:[%s3 + $0x258] sm:$0xff]
      %v1974 = vld [vmem:[%s3 + $0x260] sm:$0xff]
      %v1975 = vld [vmem:[%s3 + $0x268] sm:$0xff]
      %v1976 = vld [vmem:[%s3 + $0x270] sm:$0xff]
      %v1977 = vld [vmem:[%s3 + $0x278] sm:$0xff]
      %v1978 = vld [vmem:[%s3 + $0x280] sm:$0xff]
      %v1979 = vld [vmem:[%s3 + $0x288] sm:$0xff]
      %v1980 = vld [vmem:[%s3 + $0x290] sm:$0xff]
      %v1981 = vld [vmem:[%s3 + $0x298] sm:$0xff]
      %v1982 = vld [vmem:[%s3 + $0x2a0] sm:$0xff]
      %v1983 = vld [vmem:[%s3 + $0x2a8] sm:$0xff]
      %v1984 = vld [vmem:[%s3 + $0x2b0] sm:$0xff]
      %v1985 = vld [vmem:[%s3 + $0x2b8] sm:$0xff]
      %v1986 = vld [vmem:[%s3 + $0x2c0] sm:$0xff]
      %v1987 = vld [vmem:[%s3 + $0x2c8] sm:$0xff]
      %v1988 = vld [vmem:[%s3 + $0x2d0] sm:$0xff]
      %v1989 = vld [vmem:[%s3 + $0x2d8] sm:$0xff]
      %v1990 = vld [vmem:[%s3 + $0x2e0] sm:$0xff]
      %v1991 = vld [vmem:[%s3 + $0x2e8] sm:$0xff]
      %v1992 = vld [vmem:[%s3 + $0x2f0] sm:$0xff]
      %v1993 = vld [vmem:[%s3 + $0x2f8] sm:$0xff]
      %v1994 = vld [vmem:[%s3 + $0x300] sm:$0xff]
      %v1995 = vld [vmem:[%s3 + $0x308] sm:$0xff]
      %v1996 = vld [vmem:[%s3 + $0x310] sm:$0xff]
      %v1997 = vld [vmem:[%s3 + $0x318] sm:$0xff]
      %v1998 = vld [vmem:[%s3 + $0x320] sm:$0xff]
      %v1999 = vld [vmem:[%s3 + $0x328] sm:$0xff]
      %v2000 = vld [vmem:[%s3 + $0x330] sm:$0xff]
      %v2001 = vld [vmem:[%s3 + $0x338] sm:$0xff]
      %v2002 = vld [vmem:[%s3 + $0x340] sm:$0xff]
      %v2003 = vld [vmem:[%s3 + $0x348] sm:$0xff]
      %v2004 = vld [vmem:[%s3 + $0x350] sm:$0xff]
      %v2005 = vld [vmem:[%s3 + $0x358] sm:$0xff]
      %v2006 = vld [vmem:[%s3 + $0x360] sm:$0xff]
      %v2007 = vld [vmem:[%s3 + $0x368] sm:$0xff]
      %v2008 = vld [vmem:[%s3 + $0x370] sm:$0xff]
      %v2009 = vld [vmem:[%s3 + $0x378] sm:$0xff]
      %v2010 = vld [vmem:[%s3 + $0x380] sm:$0xff]
      %v2011 = vld [vmem:[%s3 + $0x388] sm:$0xff]
      %v2012 = vld [vmem:[%s3 + $0x390] sm:$0xff]
      %v2013 = vld [vmem:[%s3 + $0x398] sm:$0xff]
      %v2014 = vld [vmem:[%s3 + $0x3a0] sm:$0xff]
      %v2015 = vld [vmem:[%s3 + $0x3a8] sm:$0xff]
      %v2016 = vld [vmem:[%s3 + $0x3b0] sm:$0xff]
      %v2017 = vld [vmem:[%s3 + $0x3b8] sm:$0xff]
      %v2018 = vld [vmem:[%s3 + $0x3c0] sm:$0xff]
      %v2019 = vld [vmem:[%s3 + $0x3c8] sm:$0xff]
      %v2020 = vld [vmem:[%s3 + $0x3d0] sm:$0xff]
      %v2021 = vld [vmem:[%s3 + $0x3d8] sm:$0xff]
      %v2022 = vld [vmem:[%s3 + $0x3e0] sm:$0xff]
      %v2023 = vld [vmem:[%s3 + $0x3e8] sm:$0xff]
      %v2024 = vld [vmem:[%s3 + $0x3f0] sm:$0xff]
      %v2025 = vld [vmem:[%s3 + $0x3f8] sm:$0xff]
      %v2026 = vld [vmem:[%s3 + $0x400] sm:$0xff]
      %v2027 = vld [vmem:[%s3 + $0x408] sm:$0xff]
      %v2028 = vld [vmem:[%s3 + $0x410] sm:$0xff]
      %v2029 = vld [vmem:[%s3 + $0x418] sm:$0xff]
      %v2030 = vld [vmem:[%s3 + $0x420] sm:$0xff]
      %v2031 = vld [vmem:[%s3 + $0x428] sm:$0xff]
      %v2032 = vld [vmem:[%s3 + $0x430] sm:$0xff]
      %v2033 = vld [vmem:[%s3 + $0x438] sm:$0xff]
      %v2034 = vld [vmem:[%s3 + $0x440] sm:$0xff]
      %v2035 = vld [vmem:[%s3 + $0x448] sm:$0xff]
      %v2036 = vld [vmem:[%s3 + $0x450] sm:$0xff]
      %v2037 = vld [vmem:[%s3 + $0x458] sm:$0xff]
      %v2038 = vld [vmem:[%s3 + $0x460] sm:$0xff]
      %v2039 = vld [vmem:[%s3 + $0x468] sm:$0xff]
      %v2040 = vld [vmem:[%s3 + $0x470] sm:$0xff]
      %v2041 = vld [vmem:[%s3 + $0x478] sm:$0xff]
      %v2042 = vld [vmem:[%s4] sm:$0x1]
      %v2044 = vlaneseq
      %v2045 = vshrl.u32 %v2044, 7
      %v2046 = vsub.s32 0, %v2045
      %v2047 = vrot.slane %v2042, %v2046
      %2049 = vmatprep.subr.mxu0 0.0
      %2050 = vmatpush1.msra.mxu0 %v1913
      %2051 = vmatprep.subr.mxu0 0.0
      %2052 = vmatpush1.msra.mxu0 %v1912
      %2053 = vmatprep.subr.mxu0 0.0
      %2054 = vmatpush1.msra.mxu0 %v1911
      %2055 = vmatprep.subr.mxu0 0.0
      %2056 = vmatpush1.msra.mxu0 %v1910
      %2057 = vmatprep.subr.mxu0 0.0
      %2058 = vmatpush1.msra.mxu0 %v1909
      %2059 = vmatprep.subr.mxu0 0.0
      %2060 = vmatpush1.msra.mxu0 %v1908
      %2061 = vmatprep.subr.mxu0 0.0
      %2062 = vmatpush1.msra.mxu0 %v1907
      %2063 = vmatprep.subr.mxu0 0.0
      %2064 = vmatpush1.msra.mxu0 %v1906
      %2065 = vmatprep.subr.mxu0 0.0
      %2066 = vmatpush1.msra.mxu0 %v1905
      %2067 = vmatprep.subr.mxu0 0.0
      %2068 = vmatpush1.msra.mxu0 %v1904
      %2069 = vmatprep.subr.mxu0 0.0
      %2070 = vmatpush1.msra.mxu0 %v1903
      %2071 = vmatprep.subr.mxu0 0.0
      %2072 = vmatpush1.msra.mxu0 %v1902
      %2073 = vmatprep.subr.mxu0 0.0
      %2074 = vmatpush1.msra.mxu0 %v1901
      %2075 = vmatprep.subr.mxu0 0.0
      %2076 = vmatpush1.msra.mxu0 %v1900
      %2077 = vmatprep.subr.mxu0 0.0
      %2078 = vmatpush1.msra.mxu0 %v1899
      %2079 = vmatprep.subr.mxu0 0.0
      %2080 = vmatpush1.msra.mxu0 %v1898
      %2081 = vmatprep.subr.mxu0 0.0
      %2082 = vmatpush2.msra.mxu0 %v1929
      %2083 = vmatprep.subr.mxu0 0.0
      %2084 = vmatpush2.msra.mxu0 %v1928
      %2085 = vmatprep.subr.mxu0 0.0
      %2086 = vmatpush2.msra.mxu0 %v1927
      %2087 = vmatprep.subr.mxu0 0.0
      %2088 = vmatpush2.msra.mxu0 %v1926
      %2089 = vmatprep.subr.mxu0 0.0
      %2090 = vmatpush2.msra.mxu0 %v1925
      %2091 = vmatprep.subr.mxu0 0.0
      %2092 = vmatpush2.msra.mxu0 %v1924
      %2093 = vmatprep.subr.mxu0 0.0
      %2094 = vmatpush2.msra.mxu0 %v1923
      %2095 = vmatprep.subr.mxu0 0.0
      %2096 = vmatpush2.msra.mxu0 %v1922
      %2097 = vmatprep.subr.mxu0 0.0
      %2098 = vmatpush2.msra.mxu0 %v1921
      %2099 = vmatprep.subr.mxu0 0.0
      %2100 = vmatpush2.msra.mxu0 %v1920
      %2101 = vmatprep.subr.mxu0 0.0
      %2102 = vmatpush2.msra.mxu0 %v1919
      %2103 = vmatprep.subr.mxu0 0.0
      %2104 = vmatpush2.msra.mxu0 %v1918
      %2105 = vmatprep.subr.mxu0 0.0
      %2106 = vmatpush2.msra.mxu0 %v1917
      %2107 = vmatprep.subr.mxu0 0.0
      %2108 = vmatpush2.msra.mxu0 %v1916
      %2109 = vmatprep.subr.mxu0 0.0
      %2110 = vmatpush2.msra.mxu0 %v1915
      %2111 = vmatprep.subr.mxu0 0.0
      %2112 = vmatpush2.msra.mxu0 %v1914
      %2113 = vmatprep.mubr.f32.mxu0 %v1760
      %2114 = vmatmul.mubr.f32.gmra.mxu0 %v1698
      %v2115 = vpop.f32.mrf.mxu0
      %v2116 = vadd.f32 %v2047, %v2115
      %v2117 = vpop.f32.mrf.mxu0
      %2118 = vmatprep.mubr.f32.mxu0 %v1762
      %2119 = vmatmul.mubr.f32.gmra.mxu0 %v1699
      %v2120 = vpop.f32.mrf.mxu0
      %v2121 = vadd.f32 %v2047, %v2120
      %v2122 = vpop.f32.mrf.mxu0
      %2123 = vmatprep.mubr.f32.mxu0 %v1765
      %2124 = vmatmul.mubr.f32.gmra.mxu0 %v1701
      %v2125 = vpop.f32.mrf.mxu0
      %v2126 = vadd.f32 %v2047, %v2125
      %v2127 = vpop.f32.mrf.mxu0
      %2128 = vmatprep.mubr.f32.mxu0 %v1767
      %2129 = vmatmul.mubr.f32.gmra.mxu0 %v1702
      %v2130 = vpop.f32.mrf.mxu0
      %v2131 = vadd.f32 %v2047, %v2130
      %v2132 = vpop.f32.mrf.mxu0
      %2133 = vmatprep.mubr.f32.mxu0 %v1770
      %2134 = vmatmul.mubr.f32.gmra.mxu0 %v1704
      %v2135 = vpop.f32.mrf.mxu0
      %v2136 = vadd.f32 %v2047, %v2135
      %v2137 = vpop.f32.mrf.mxu0
      %2138 = vmatprep.mubr.f32.mxu0 %v1772
      %2139 = vmatmul.mubr.f32.gmra.mxu0 %v1705
      %v2140 = vpop.f32.mrf.mxu0
      %v2141 = vadd.f32 %v2047, %v2140
      %v2142 = vpop.f32.mrf.mxu0
      %2143 = vmatprep.mubr.f32.mxu0 %v1775
      %2144 = vmatmul.mubr.f32.gmra.mxu0 %v1707
      %v2145 = vpop.f32.mrf.mxu0
      %v2146 = vadd.f32 %v2047, %v2145
      %v2147 = vpop.f32.mrf.mxu0
      %2148 = vmatprep.mubr.f32.mxu0 %v1777
      %2149 = vmatmul.mubr.f32.gmra.mxu0 %v1708
      %v2150 = vpop.f32.mrf.mxu0
      %v2151 = vadd.f32 %v2047, %v2150
      %v2152 = vpop.f32.mrf.mxu0
      %2153 = vmatprep.mubr.f32.mxu0 %v1780
      %2154 = vmatmul.mubr.f32.gmra.mxu0 %v1710
      %v2155 = vpop.f32.mrf.mxu0
      %v2156 = vadd.f32 %v2047, %v2155
      %v2157 = vpop.f32.mrf.mxu0
      %2158 = vmatprep.mubr.f32.mxu0 %v1782
      %2159 = vmatmul.mubr.f32.gmra.mxu0 %v1711
      %v2160 = vpop.f32.mrf.mxu0
      %v2161 = vadd.f32 %v2047, %v2160
      %v2162 = vpop.f32.mrf.mxu0
      %2163 = vmatprep.mubr.f32.mxu0 %v1785
      %2164 = vmatmul.mubr.f32.gmra.mxu0 %v1713
      %v2165 = vpop.f32.mrf.mxu0
      %v2166 = vadd.f32 %v2047, %v2165
      %v2167 = vpop.f32.mrf.mxu0
      %2168 = vmatprep.mubr.f32.mxu0 %v1787
      %2169 = vmatmul.mubr.f32.gmra.mxu0 %v1714
      %v2170 = vpop.f32.mrf.mxu0
      %v2171 = vadd.f32 %v2047, %v2170
      %v2172 = vpop.f32.mrf.mxu0
      %2173 = vmatprep.mubr.f32.mxu0 %v1790
      %2174 = vmatmul.mubr.f32.gmra.mxu0 %v1716
      %v2175 = vpop.f32.mrf.mxu0
      %v2176 = vadd.f32 %v2047, %v2175
      %v2177 = vpop.f32.mrf.mxu0
      %2178 = vmatprep.mubr.f32.mxu0 %v1792
      %2179 = vmatmul.mubr.f32.gmra.mxu0 %v1717
      %v2180 = vpop.f32.mrf.mxu0
      %v2181 = vadd.f32 %v2047, %v2180
      %v2182 = vpop.f32.mrf.mxu0
      %2183 = vmatprep.mubr.f32.mxu0 %v1795
      %2184 = vmatmul.mubr.f32.gmra.mxu0 %v1719
      %v2185 = vpop.f32.mrf.mxu0
      %v2186 = vadd.f32 %v2047, %v2185
      %v2187 = vpop.f32.mrf.mxu0
      %2188 = vmatprep.mubr.f32.mxu0 %v1797
      %2189 = vmatmul.mubr.f32.gmra.mxu0 %v1720
      %v2190 = vpop.f32.mrf.mxu0
      %v2191 = vadd.f32 %v2047, %v2190
      %v2192 = vpop.f32.mrf.mxu0
      %2193 = vdwg.mxu0
      %2194 = vmatprep.subr.mxu0 0.0
      %2195 = vmatpush1.msra.mxu0 %v1945
      %2196 = vmatprep.subr.mxu0 0.0
      %2197 = vmatpush1.msra.mxu0 %v1944
      %2198 = vmatprep.subr.mxu0 0.0
      %2199 = vmatpush1.msra.mxu0 %v1943
      %2200 = vmatprep.subr.mxu0 0.0
      %2201 = vmatpush1.msra.mxu0 %v1942
      %2202 = vmatprep.subr.mxu0 0.0
      %2203 = vmatpush1.msra.mxu0 %v1941
      %2204 = vmatprep.subr.mxu0 0.0
      %2205 = vmatpush1.msra.mxu0 %v1940
      %2206 = vmatprep.subr.mxu0 0.0
      %2207 = vmatpush1.msra.mxu0 %v1939
      %2208 = vmatprep.subr.mxu0 0.0
      %2209 = vmatpush1.msra.mxu0 %v1938
      %2210 = vmatprep.subr.mxu0 0.0
      %2211 = vmatpush1.msra.mxu0 %v1937
      %2212 = vmatprep.subr.mxu0 0.0
      %2213 = vmatpush1.msra.mxu0 %v1936
      %2214 = vmatprep.subr.mxu0 0.0
      %2215 = vmatpush1.msra.mxu0 %v1935
      %2216 = vmatprep.subr.mxu0 0.0
      %2217 = vmatpush1.msra.mxu0 %v1934
      %2218 = vmatprep.subr.mxu0 0.0
      %2219 = vmatpush1.msra.mxu0 %v1933
      %2220 = vmatprep.subr.mxu0 0.0
      %2221 = vmatpush1.msra.mxu0 %v1932
      %2222 = vmatprep.subr.mxu0 0.0
      %2223 = vmatpush1.msra.mxu0 %v1931
      %2224 = vmatprep.subr.mxu0 0.0
      %2225 = vmatpush1.msra.mxu0 %v1930
      %2226 = vmatprep.subr.mxu0 0.0
      %2227 = vmatpush2.msra.mxu0 %v1961
      %2228 = vmatprep.subr.mxu0 0.0
      %2229 = vmatpush2.msra.mxu0 %v1960
      %2230 = vmatprep.subr.mxu0 0.0
      %2231 = vmatpush2.msra.mxu0 %v1959
      %2232 = vmatprep.subr.mxu0 0.0
      %2233 = vmatpush2.msra.mxu0 %v1958
      %2234 = vmatprep.subr.mxu0 0.0
      %2235 = vmatpush2.msra.mxu0 %v1957
      %2236 = vmatprep.subr.mxu0 0.0
      %2237 = vmatpush2.msra.mxu0 %v1956
      %2238 = vmatprep.subr.mxu0 0.0
      %2239 = vmatpush2.msra.mxu0 %v1955
      %2240 = vmatprep.subr.mxu0 0.0
      %2241 = vmatpush2.msra.mxu0 %v1954
      %2242 = vmatprep.subr.mxu0 0.0
      %2243 = vmatpush2.msra.mxu0 %v1953
      %2244 = vmatprep.subr.mxu0 0.0
      %2245 = vmatpush2.msra.mxu0 %v1952
      %2246 = vmatprep.subr.mxu0 0.0
      %2247 = vmatpush2.msra.mxu0 %v1951
      %2248 = vmatprep.subr.mxu0 0.0
      %2249 = vmatpush2.msra.mxu0 %v1950
      %2250 = vmatprep.subr.mxu0 0.0
      %2251 = vmatpush2.msra.mxu0 %v1949
      %2252 = vmatprep.subr.mxu0 0.0
      %2253 = vmatpush2.msra.mxu0 %v1948
      %2254 = vmatprep.subr.mxu0 0.0
      %2255 = vmatpush2.msra.mxu0 %v1947
      %2256 = vmatprep.subr.mxu0 0.0
      %2257 = vmatpush2.msra.mxu0 %v1946
      %2258 = vmatprep.mubr.f32.mxu0 %v1701
      %2259 = vmatmul.mubr.f32.gmra.mxu0 %v1830
      %v2260 = vpop.f32.mrf.mxu0
      %v2261 = vadd.f32 %v2116, %v2260
      %v2262 = vpop.f32.mrf.mxu0
      %2263 = vmatprep.mubr.f32.mxu0 %v1702
      %2264 = vmatmul.mubr.f32.gmra.mxu0 %v1832
      %v2265 = vpop.f32.mrf.mxu0
      %v2266 = vadd.f32 %v2121, %v2265
      %v2267 = vpop.f32.mrf.mxu0
      %2268 = vmatprep.mubr.f32.mxu0 %v1704
      %2269 = vmatmul.mubr.f32.gmra.mxu0 %v1835
      %v2270 = vpop.f32.mrf.mxu0
      %v2271 = vadd.f32 %v2126, %v2270
      %v2272 = vpop.f32.mrf.mxu0
      %2273 = vmatprep.mubr.f32.mxu0 %v1705
      %2274 = vmatmul.mubr.f32.gmra.mxu0 %v1837
      %v2275 = vpop.f32.mrf.mxu0
      %v2276 = vadd.f32 %v2131, %v2275
      %v2277 = vpop.f32.mrf.mxu0
      %2278 = vmatprep.mubr.f32.mxu0 %v1707
      %2279 = vmatmul.mubr.f32.gmra.mxu0 %v1840
      %v2280 = vpop.f32.mrf.mxu0
      %v2281 = vadd.f32 %v2136, %v2280
      %v2282 = vpop.f32.mrf.mxu0
      %2283 = vmatprep.mubr.f32.mxu0 %v1708
      %2284 = vmatmul.mubr.f32.gmra.mxu0 %v1842
      %v2285 = vpop.f32.mrf.mxu0
      %v2286 = vadd.f32 %v2141, %v2285
      %v2287 = vpop.f32.mrf.mxu0
      %2288 = vmatprep.mubr.f32.mxu0 %v1710
      %2289 = vmatmul.mubr.f32.gmra.mxu0 %v1845
      %v2290 = vpop.f32.mrf.mxu0
      %v2291 = vadd.f32 %v2146, %v2290
      %v2292 = vpop.f32.mrf.mxu0
      %2293 = vmatprep.mubr.f32.mxu0 %v1711
      %2294 = vmatmul.mubr.f32.gmra.mxu0 %v1847
      %v2295 = vpop.f32.mrf.mxu0
      %v2296 = vadd.f32 %v2151, %v2295
      %v2297 = vpop.f32.mrf.mxu0
      %2298 = vmatprep.mubr.f32.mxu0 %v1713
      %2299 = vmatmul.mubr.f32.gmra.mxu0 %v1850
      %v2300 = vpop.f32.mrf.mxu0
      %v2301 = vadd.f32 %v2156, %v2300
      %v2302 = vpop.f32.mrf.mxu0
      %2303 = vmatprep.mubr.f32.mxu0 %v1714
      %2304 = vmatmul.mubr.f32.gmra.mxu0 %v1852
      %v2305 = vpop.f32.mrf.mxu0
      %v2306 = vadd.f32 %v2161, %v2305
      %v2307 = vpop.f32.mrf.mxu0
      %2308 = vmatprep.mubr.f32.mxu0 %v1716
      %2309 = vmatmul.mubr.f32.gmra.mxu0 %v1855
      %v2310 = vpop.f32.mrf.mxu0
      %v2311 = vadd.f32 %v2166, %v2310
      %v2312 = vpop.f32.mrf.mxu0
      %2313 = vmatprep.mubr.f32.mxu0 %v1717
      %2314 = vmatmul.mubr.f32.gmra.mxu0 %v1857
      %v2315 = vpop.f32.mrf.mxu0
      %v2316 = vadd.f32 %v2171, %v2315
      %v2317 = vpop.f32.mrf.mxu0
      %2318 = vmatprep.mubr.f32.mxu0 %v1719
      %2319 = vmatmul.mubr.f32.gmra.mxu0 %v1860
      %v2320 = vpop.f32.mrf.mxu0
      %v2321 = vadd.f32 %v2176, %v2320
      %v2322 = vpop.f32.mrf.mxu0
      %2323 = vmatprep.mubr.f32.mxu0 %v1720
      %2324 = vmatmul.mubr.f32.gmra.mxu0 %v1862
      %v2325 = vpop.f32.mrf.mxu0
      %v2326 = vadd.f32 %v2181, %v2325
      %v2327 = vpop.f32.mrf.mxu0
      %2328 = vmatprep.mubr.f32.mxu0 %v1722
      %2329 = vmatmul.mubr.f32.gmra.mxu0 %v1865
      %v2330 = vpop.f32.mrf.mxu0
      %v2331 = vadd.f32 %v2186, %v2330
      %v2332 = vpop.f32.mrf.mxu0
      %2333 = vmatprep.mubr.f32.mxu0 %v1723
      %2334 = vmatmul.mubr.f32.gmra.mxu0 %v1867
      %v2335 = vpop.f32.mrf.mxu0
      %v2336 = vadd.f32 %v2191, %v2335
      %v2337 = vpop.f32.mrf.mxu0
      %2338 = vdwg.mxu0
      %2339 = vmatprep.subr.mxu0 0.0
      %2340 = vmatpush1.msra.mxu0 %v1977
      %2341 = vmatprep.subr.mxu0 0.0
      %2342 = vmatpush1.msra.mxu0 %v1976
      %2343 = vmatprep.subr.mxu0 0.0
      %2344 = vmatpush1.msra.mxu0 %v1975
      %2345 = vmatprep.subr.mxu0 0.0
      %2346 = vmatpush1.msra.mxu0 %v1974
      %2347 = vmatprep.subr.mxu0 0.0
      %2348 = vmatpush1.msra.mxu0 %v1973
      %2349 = vmatprep.subr.mxu0 0.0
      %2350 = vmatpush1.msra.mxu0 %v1972
      %2351 = vmatprep.subr.mxu0 0.0
      %2352 = vmatpush1.msra.mxu0 %v1971
      %2353 = vmatprep.subr.mxu0 0.0
      %2354 = vmatpush1.msra.mxu0 %v1970
      %2355 = vmatprep.subr.mxu0 0.0
      %2356 = vmatpush1.msra.mxu0 %v1969
      %2357 = vmatprep.subr.mxu0 0.0
      %2358 = vmatpush1.msra.mxu0 %v1968
      %2359 = vmatprep.subr.mxu0 0.0
      %2360 = vmatpush1.msra.mxu0 %v1967
      %2361 = vmatprep.subr.mxu0 0.0
      %2362 = vmatpush1.msra.mxu0 %v1966
      %2363 = vmatprep.subr.mxu0 0.0
      %2364 = vmatpush1.msra.mxu0 %v1965
      %2365 = vmatprep.subr.mxu0 0.0
      %2366 = vmatpush1.msra.mxu0 %v1964
      %2367 = vmatprep.subr.mxu0 0.0
      %2368 = vmatpush1.msra.mxu0 %v1963
      %2369 = vmatprep.subr.mxu0 0.0
      %2370 = vmatpush1.msra.mxu0 %v1962
      %2371 = vmatprep.subr.mxu0 0.0
      %2372 = vmatpush2.msra.mxu0 %v1993
      %2373 = vmatprep.subr.mxu0 0.0
      %2374 = vmatpush2.msra.mxu0 %v1992
      %2375 = vmatprep.subr.mxu0 0.0
      %2376 = vmatpush2.msra.mxu0 %v1991
      %2377 = vmatprep.subr.mxu0 0.0
      %2378 = vmatpush2.msra.mxu0 %v1990
      %2379 = vmatprep.subr.mxu0 0.0
      %2380 = vmatpush2.msra.mxu0 %v1989
      %2381 = vmatprep.subr.mxu0 0.0
      %2382 = vmatpush2.msra.mxu0 %v1988
      %2383 = vmatprep.subr.mxu0 0.0
      %2384 = vmatpush2.msra.mxu0 %v1987
      %2385 = vmatprep.subr.mxu0 0.0
      %2386 = vmatpush2.msra.mxu0 %v1986
      %2387 = vmatprep.subr.mxu0 0.0
      %2388 = vmatpush2.msra.mxu0 %v1985
      %2389 = vmatprep.subr.mxu0 0.0
      %2390 = vmatpush2.msra.mxu0 %v1984
      %2391 = vmatprep.subr.mxu0 0.0
      %2392 = vmatpush2.msra.mxu0 %v1983
      %2393 = vmatprep.subr.mxu0 0.0
      %2394 = vmatpush2.msra.mxu0 %v1982
      %2395 = vmatprep.subr.mxu0 0.0
      %2396 = vmatpush2.msra.mxu0 %v1981
      %2397 = vmatprep.subr.mxu0 0.0
      %2398 = vmatpush2.msra.mxu0 %v1980
      %2399 = vmatprep.subr.mxu0 0.0
      %2400 = vmatpush2.msra.mxu0 %v1979
      %2401 = vmatprep.subr.mxu0 0.0
      %2402 = vmatpush2.msra.mxu0 %v1978
      %2403 = vmatprep.mubr.f32.mxu0 %v1835
      %2404 = vmatmul.mubr.f32.gmra.mxu0 %v1765
      %v2405 = vpop.f32.mrf.mxu0
      %v2406 = vadd.f32 %v2261, %v2405
      %v2407 = vpop.f32.mrf.mxu0
      %2408 = vmatprep.mubr.f32.mxu0 %v1837
      %2409 = vmatmul.mubr.f32.gmra.mxu0 %v1767
      %v2410 = vpop.f32.mrf.mxu0
      %v2411 = vadd.f32 %v2266, %v2410
      %v2412 = vpop.f32.mrf.mxu0
      %2413 = vmatprep.mubr.f32.mxu0 %v1840
      %2414 = vmatmul.mubr.f32.gmra.mxu0 %v1770
      %v2415 = vpop.f32.mrf.mxu0
      %v2416 = vadd.f32 %v2271, %v2415
      %v2417 = vpop.f32.mrf.mxu0
      %2418 = vmatprep.mubr.f32.mxu0 %v1842
      %2419 = vmatmul.mubr.f32.gmra.mxu0 %v1772
      %v2420 = vpop.f32.mrf.mxu0
      %v2421 = vadd.f32 %v2276, %v2420
      %v2422 = vpop.f32.mrf.mxu0
      %2423 = vmatprep.mubr.f32.mxu0 %v1845
      %2424 = vmatmul.mubr.f32.gmra.mxu0 %v1775
      %v2425 = vpop.f32.mrf.mxu0
      %v2426 = vadd.f32 %v2281, %v2425
      %v2427 = vpop.f32.mrf.mxu0
      %2428 = vmatprep.mubr.f32.mxu0 %v1847
      %2429 = vmatmul.mubr.f32.gmra.mxu0 %v1777
      %v2430 = vpop.f32.mrf.mxu0
      %v2431 = vadd.f32 %v2286, %v2430
      %v2432 = vpop.f32.mrf.mxu0
      %2433 = vmatprep.mubr.f32.mxu0 %v1850
      %2434 = vmatmul.mubr.f32.gmra.mxu0 %v1780
      %v2435 = vpop.f32.mrf.mxu0
      %v2436 = vadd.f32 %v2291, %v2435
      %v2437 = vpop.f32.mrf.mxu0
      %2438 = vmatprep.mubr.f32.mxu0 %v1852
      %2439 = vmatmul.mubr.f32.gmra.mxu0 %v1782
      %v2440 = vpop.f32.mrf.mxu0
      %v2441 = vadd.f32 %v2296, %v2440
      %v2442 = vpop.f32.mrf.mxu0
      %2443 = vmatprep.mubr.f32.mxu0 %v1855
      %2444 = vmatmul.mubr.f32.gmra.mxu0 %v1785
      %v2445 = vpop.f32.mrf.mxu0
      %v2446 = vadd.f32 %v2301, %v2445
      %v2447 = vpop.f32.mrf.mxu0
      %2448 = vmatprep.mubr.f32.mxu0 %v1857
      %2449 = vmatmul.mubr.f32.gmra.mxu0 %v1787
      %v2450 = vpop.f32.mrf.mxu0
      %v2451 = vadd.f32 %v2306, %v2450
      %v2452 = vpop.f32.mrf.mxu0
      %2453 = vmatprep.mubr.f32.mxu0 %v1860
      %2454 = vmatmul.mubr.f32.gmra.mxu0 %v1790
      %v2455 = vpop.f32.mrf.mxu0
      %v2456 = vadd.f32 %v2311, %v2455
      %v2457 = vpop.f32.mrf.mxu0
      %2458 = vmatprep.mubr.f32.mxu0 %v1862
      %2459 = vmatmul.mubr.f32.gmra.mxu0 %v1792
      %v2460 = vpop.f32.mrf.mxu0
      %v2461 = vadd.f32 %v2316, %v2460
      %v2462 = vpop.f32.mrf.mxu0
      %2463 = vmatprep.mubr.f32.mxu0 %v1865
      %2464 = vmatmul.mubr.f32.gmra.mxu0 %v1795
      %v2465 = vpop.f32.mrf.mxu0
      %v2466 = vadd.f32 %v2321, %v2465
      %v2467 = vpop.f32.mrf.mxu0
      %2468 = vmatprep.mubr.f32.mxu0 %v1867
      %2469 = vmatmul.mubr.f32.gmra.mxu0 %v1797
      %v2470 = vpop.f32.mrf.mxu0
      %v2471 = vadd.f32 %v2326, %v2470
      %v2472 = vpop.f32.mrf.mxu0
      %2473 = vmatprep.mubr.f32.mxu0 %v1870
      %2474 = vmatmul.mubr.f32.gmra.mxu0 %v1800
      %v2475 = vpop.f32.mrf.mxu0
      %v2476 = vadd.f32 %v2331, %v2475
      %v2477 = vpop.f32.mrf.mxu0
      %2478 = vmatprep.mubr.f32.mxu0 %v1872
      %2479 = vmatmul.mubr.f32.gmra.mxu0 %v1802
      %v2480 = vpop.f32.mrf.mxu0
      %v2481 = vadd.f32 %v2336, %v2480
      %v2482 = vpop.f32.mrf.mxu0
      %2483 = vdwg.mxu0
      %2484 = vmatprep.subr.mxu0 0.0
      %2485 = vmatpush1.msra.mxu0 %v2009
      %2486 = vmatprep.subr.mxu0 0.0
      %2487 = vmatpush1.msra.mxu0 %v2008
      %2488 = vmatprep.subr.mxu0 0.0
      %2489 = vmatpush1.msra.mxu0 %v2007
      %2490 = vmatprep.subr.mxu0 0.0
      %2491 = vmatpush1.msra.mxu0 %v2006
      %2492 = vmatprep.subr.mxu0 0.0
      %2493 = vmatpush1.msra.mxu0 %v2005
      %2494 = vmatprep.subr.mxu0 0.0
      %2495 = vmatpush1.msra.mxu0 %v2004
      %2496 = vmatprep.subr.mxu0 0.0
      %2497 = vmatpush1.msra.mxu0 %v2003
      %2498 = vmatprep.subr.mxu0 0.0
      %2499 = vmatpush1.msra.mxu0 %v2002
      %2500 = vmatprep.subr.mxu0 0.0
      %2501 = vmatpush1.msra.mxu0 %v2001
      %2502 = vmatprep.subr.mxu0 0.0
      %2503 = vmatpush1.msra.mxu0 %v2000
      %2504 = vmatprep.subr.mxu0 0.0
      %2505 = vmatpush1.msra.mxu0 %v1999
      %2506 = vmatprep.subr.mxu0 0.0
      %2507 = vmatpush1.msra.mxu0 %v1998
      %2508 = vmatprep.subr.mxu0 0.0
      %2509 = vmatpush1.msra.mxu0 %v1997
      %2510 = vmatprep.subr.mxu0 0.0
      %2511 = vmatpush1.msra.mxu0 %v1996
      %2512 = vmatprep.subr.mxu0 0.0
      %2513 = vmatpush1.msra.mxu0 %v1995
      %2514 = vmatprep.subr.mxu0 0.0
      %2515 = vmatpush1.msra.mxu0 %v1994
      %2516 = vmatprep.subr.mxu0 0.0
      %2517 = vmatpush2.msra.mxu0 %v2025
      %2518 = vmatprep.subr.mxu0 0.0
      %2519 = vmatpush2.msra.mxu0 %v2024
      %2520 = vmatprep.subr.mxu0 0.0
      %2521 = vmatpush2.msra.mxu0 %v2023
      %2522 = vmatprep.subr.mxu0 0.0
      %2523 = vmatpush2.msra.mxu0 %v2022
      %2524 = vmatprep.subr.mxu0 0.0
      %2525 = vmatpush2.msra.mxu0 %v2021
      %2526 = vmatprep.subr.mxu0 0.0
      %2527 = vmatpush2.msra.mxu0 %v2020
      %2528 = vmatprep.subr.mxu0 0.0
      %2529 = vmatpush2.msra.mxu0 %v2019
      %2530 = vmatprep.subr.mxu0 0.0
      %2531 = vmatpush2.msra.mxu0 %v2018
      %2532 = vmatprep.subr.mxu0 0.0
      %2533 = vmatpush2.msra.mxu0 %v2017
      %2534 = vmatprep.subr.mxu0 0.0
      %2535 = vmatpush2.msra.mxu0 %v2016
      %2536 = vmatprep.subr.mxu0 0.0
      %2537 = vmatpush2.msra.mxu0 %v2015
      %2538 = vmatprep.subr.mxu0 0.0
      %2539 = vmatpush2.msra.mxu0 %v2014
      %2540 = vmatprep.subr.mxu0 0.0
      %2541 = vmatpush2.msra.mxu0 %v2013
      %2542 = vmatprep.subr.mxu0 0.0
      %2543 = vmatpush2.msra.mxu0 %v2012
      %2544 = vmatprep.subr.mxu0 0.0
      %2545 = vmatpush2.msra.mxu0 %v2011
      %2546 = vmatprep.subr.mxu0 0.0
      %2547 = vmatpush2.msra.mxu0 %v2010
      %2548 = vmatprep.mubr.f32.mxu0 %v1770
      %2549 = vmatmul.mubr.f32.gmra.mxu0 %v1704
      %v2550 = vpop.f32.mrf.mxu0
      %v2551 = vadd.f32 %v2406, %v2550
      %v2552 = vpop.f32.mrf.mxu0
      %2553 = vmatprep.mubr.f32.mxu0 %v1772
      %2554 = vmatmul.mubr.f32.gmra.mxu0 %v1705
      %v2555 = vpop.f32.mrf.mxu0
      %v2556 = vadd.f32 %v2411, %v2555
      %v2557 = vpop.f32.mrf.mxu0
      %2558 = vmatprep.mubr.f32.mxu0 %v1775
      %2559 = vmatmul.mubr.f32.gmra.mxu0 %v1707
      %v2560 = vpop.f32.mrf.mxu0
      %v2561 = vadd.f32 %v2416, %v2560
      %v2562 = vpop.f32.mrf.mxu0
      %2563 = vmatprep.mubr.f32.mxu0 %v1777
      %2564 = vmatmul.mubr.f32.gmra.mxu0 %v1708
      %v2565 = vpop.f32.mrf.mxu0
      %v2566 = vadd.f32 %v2421, %v2565
      %v2567 = vpop.f32.mrf.mxu0
      %2568 = vmatprep.mubr.f32.mxu0 %v1780
      %2569 = vmatmul.mubr.f32.gmra.mxu0 %v1710
      %v2570 = vpop.f32.mrf.mxu0
      %v2571 = vadd.f32 %v2426, %v2570
      %v2572 = vpop.f32.mrf.mxu0
      %2573 = vmatprep.mubr.f32.mxu0 %v1782
      %2574 = vmatmul.mubr.f32.gmra.mxu0 %v1711
      %v2575 = vpop.f32.mrf.mxu0
      %v2576 = vadd.f32 %v2431, %v2575
      %v2577 = vpop.f32.mrf.mxu0
      %2578 = vmatprep.mubr.f32.mxu0 %v1785
      %2579 = vmatmul.mubr.f32.gmra.mxu0 %v1713
      %v2580 = vpop.f32.mrf.mxu0
      %v2581 = vadd.f32 %v2436, %v2580
      %v2582 = vpop.f32.mrf.mxu0
      %2583 = vmatprep.mubr.f32.mxu0 %v1787
      %2584 = vmatmul.mubr.f32.gmra.mxu0 %v1714
      %v2585 = vpop.f32.mrf.mxu0
      %v2586 = vadd.f32 %v2441, %v2585
      %v2587 = vpop.f32.mrf.mxu0
      %2588 = vmatprep.mubr.f32.mxu0 %v1790
      %2589 = vmatmul.mubr.f32.gmra.mxu0 %v1716
      %v2590 = vpop.f32.mrf.mxu0
      %v2591 = vadd.f32 %v2446, %v2590
      %v2592 = vpop.f32.mrf.mxu0
      %2593 = vmatprep.mubr.f32.mxu0 %v1792
      %2594 = vmatmul.mubr.f32.gmra.mxu0 %v1717
      %v2595 = vpop.f32.mrf.mxu0
      %v2596 = vadd.f32 %v2451, %v2595
      %v2597 = vpop.f32.mrf.mxu0
      %2598 = vmatprep.mubr.f32.mxu0 %v1795
      %2599 = vmatmul.mubr.f32.gmra.mxu0 %v1719
      %v2600 = vpop.f32.mrf.mxu0
      %v2601 = vadd.f32 %v2456, %v2600
      %v2602 = vpop.f32.mrf.mxu0
      %2603 = vmatprep.mubr.f32.mxu0 %v1797
      %2604 = vmatmul.mubr.f32.gmra.mxu0 %v1720
      %v2605 = vpop.f32.mrf.mxu0
      %v2606 = vadd.f32 %v2461, %v2605
      %v2607 = vpop.f32.mrf.mxu0
      %2608 = vmatprep.mubr.f32.mxu0 %v1800
      %2609 = vmatmul.mubr.f32.gmra.mxu0 %v1722
      %v2610 = vpop.f32.mrf.mxu0
      %v2611 = vadd.f32 %v2466, %v2610
      %v2612 = vpop.f32.mrf.mxu0
      %2613 = vmatprep.mubr.f32.mxu0 %v1802
      %2614 = vmatmul.mubr.f32.gmra.mxu0 %v1723
      %v2615 = vpop.f32.mrf.mxu0
      %v2616 = vadd.f32 %v2471, %v2615
      %v2617 = vpop.f32.mrf.mxu0
      %2618 = vmatprep.mubr.f32.mxu0 %v1805
      %2619 = vmatmul.mubr.f32.gmra.mxu0 %v1725
      %v2620 = vpop.f32.mrf.mxu0
      %v2621 = vadd.f32 %v2476, %v2620
      %v2622 = vpop.f32.mrf.mxu0
      %2623 = vmatprep.mubr.f32.mxu0 %v1807
      %2624 = vmatmul.mubr.f32.gmra.mxu0 %v1726
      %v2625 = vpop.f32.mrf.mxu0
      %v2626 = vadd.f32 %v2481, %v2625
      %v2627 = vpop.f32.mrf.mxu0
      %2628 = vdwg.mxu0
      %2629 = vmatprep.subr.mxu0 0.0
      %2630 = vmatpush1.msra.mxu0 %v2041
      %2631 = vmatprep.subr.mxu0 0.0
      %2632 = vmatpush1.msra.mxu0 %v2040
      %2633 = vmatprep.subr.mxu0 0.0
      %2634 = vmatpush1.msra.mxu0 %v2039
      %2635 = vmatprep.subr.mxu0 0.0
      %2636 = vmatpush1.msra.mxu0 %v2038
      %2637 = vmatprep.subr.mxu0 0.0
      %2638 = vmatpush1.msra.mxu0 %v2037
      %2639 = vmatprep.subr.mxu0 0.0
      %2640 = vmatpush1.msra.mxu0 %v2036
      %2641 = vmatprep.subr.mxu0 0.0
      %2642 = vmatpush1.msra.mxu0 %v2035
      %2643 = vmatprep.subr.mxu0 0.0
      %2644 = vmatpush1.msra.mxu0 %v2034
      %2645 = vmatprep.subr.mxu0 0.0
      %2646 = vmatpush1.msra.mxu0 %v2033
      %2647 = vmatprep.subr.mxu0 0.0
      %2648 = vmatpush1.msra.mxu0 %v2032
      %2649 = vmatprep.subr.mxu0 0.0
      %2650 = vmatpush1.msra.mxu0 %v2031
      %2651 = vmatprep.subr.mxu0 0.0
      %2652 = vmatpush1.msra.mxu0 %v2030
      %2653 = vmatprep.subr.mxu0 0.0
      %2654 = vmatpush1.msra.mxu0 %v2029
      %2655 = vmatprep.subr.mxu0 0.0
      %2656 = vmatpush1.msra.mxu0 %v2028
      %2657 = vmatprep.subr.mxu0 0.0
      %2658 = vmatpush1.msra.mxu0 %v2027
      %2659 = vmatprep.subr.mxu0 0.0
      %2660 = vmatpush1.msra.mxu0 %v2026
      %2661 = vmatprep.subr.mxu0 0.0
      %2662 = vmatpush2.msra.mxu0 0.0
      %2663 = vmatprep.subr.mxu0 0.0
      %2664 = vmatpush2.msra.mxu0 0.0
      %2665 = vmatprep.subr.mxu0 0.0
      %2666 = vmatpush2.msra.mxu0 0.0
      %2667 = vmatprep.subr.mxu0 0.0
      %2668 = vmatpush2.msra.mxu0 0.0
      %2669 = vmatprep.subr.mxu0 0.0
      %2670 = vmatpush2.msra.mxu0 0.0
      %2671 = vmatprep.subr.mxu0 0.0
      %2672 = vmatpush2.msra.mxu0 0.0
      %2673 = vmatprep.subr.mxu0 0.0
      %2674 = vmatpush2.msra.mxu0 0.0
      %2675 = vmatprep.subr.mxu0 0.0
      %2676 = vmatpush2.msra.mxu0 0.0
      %2677 = vmatprep.subr.mxu0 0.0
      %2678 = vmatpush2.msra.mxu0 0.0
      %2679 = vmatprep.subr.mxu0 0.0
      %2680 = vmatpush2.msra.mxu0 0.0
      %2681 = vmatprep.subr.mxu0 0.0
      %2682 = vmatpush2.msra.mxu0 0.0
      %2683 = vmatprep.subr.mxu0 0.0
      %2684 = vmatpush2.msra.mxu0 0.0
      %2685 = vmatprep.subr.mxu0 0.0
      %2686 = vmatpush2.msra.mxu0 0.0
      %2687 = vmatprep.subr.mxu0 0.0
      %2688 = vmatpush2.msra.mxu0 0.0
      %2689 = vmatprep.subr.mxu0 0.0
      %2690 = vmatpush2.msra.mxu0 0.0
      %2691 = vmatprep.subr.mxu0 0.0
      %2692 = vmatpush2.msra.mxu0 0.0
      %2693 = vmatprep.mubr.f32.mxu0 0.0
      %2694 = vmatmul.mubr.f32.gmra.mxu0 %v1840
      %v2695 = vpop.f32.mrf.mxu0
      %v2696 = vadd.f32 %v2551, %v2695
      %v2697 = vpop.f32.mrf.mxu0
      %2698 = vmatprep.mubr.f32.mxu0 0.0
      %2699 = vmatmul.mubr.f32.gmra.mxu0 %v1842
      %v2700 = vpop.f32.mrf.mxu0
      %v2701 = vadd.f32 %v2556, %v2700
      %v2702 = vpop.f32.mrf.mxu0
      %2703 = vmatprep.mubr.f32.mxu0 0.0
      %2704 = vmatmul.mubr.f32.gmra.mxu0 %v1845
      %v2705 = vpop.f32.mrf.mxu0
      %v2706 = vadd.f32 %v2561, %v2705
      %v2707 = vpop.f32.mrf.mxu0
      %2708 = vmatprep.mubr.f32.mxu0 0.0
      %2709 = vmatmul.mubr.f32.gmra.mxu0 %v1847
      %v2710 = vpop.f32.mrf.mxu0
      %v2711 = vadd.f32 %v2566, %v2710
      %v2712 = vpop.f32.mrf.mxu0
      %2713 = vmatprep.mubr.f32.mxu0 0.0
      %2714 = vmatmul.mubr.f32.gmra.mxu0 %v1850
      %v2715 = vpop.f32.mrf.mxu0
      %v2716 = vadd.f32 %v2571, %v2715
      %v2717 = vpop.f32.mrf.mxu0
      %2718 = vmatprep.mubr.f32.mxu0 0.0
      %2719 = vmatmul.mubr.f32.gmra.mxu0 %v1852
      %v2720 = vpop.f32.mrf.mxu0
      %v2721 = vadd.f32 %v2576, %v2720
      %v2722 = vpop.f32.mrf.mxu0
      %2723 = vmatprep.mubr.f32.mxu0 0.0
      %2724 = vmatmul.mubr.f32.gmra.mxu0 %v1855
      %v2725 = vpop.f32.mrf.mxu0
      %v2726 = vadd.f32 %v2581, %v2725
      %v2727 = vpop.f32.mrf.mxu0
      %2728 = vmatprep.mubr.f32.mxu0 0.0
      %2729 = vmatmul.mubr.f32.gmra.mxu0 %v1857
      %v2730 = vpop.f32.mrf.mxu0
      %v2731 = vadd.f32 %v2586, %v2730
      %v2732 = vpop.f32.mrf.mxu0
      %2733 = vmatprep.mubr.f32.mxu0 0.0
      %2734 = vmatmul.mubr.f32.gmra.mxu0 %v1860
      %v2735 = vpop.f32.mrf.mxu0
      %v2736 = vadd.f32 %v2591, %v2735
      %v2737 = vpop.f32.mrf.mxu0
      %2738 = vmatprep.mubr.f32.mxu0 0.0
      %2739 = vmatmul.mubr.f32.gmra.mxu0 %v1862
      %v2740 = vpop.f32.mrf.mxu0
      %v2741 = vadd.f32 %v2596, %v2740
      %v2742 = vpop.f32.mrf.mxu0
      %2743 = vmatprep.mubr.f32.mxu0 0.0
      %2744 = vmatmul.mubr.f32.gmra.mxu0 %v1865
      %v2745 = vpop.f32.mrf.mxu0
      %v2746 = vadd.f32 %v2601, %v2745
      %v2747 = vpop.f32.mrf.mxu0
      %2748 = vmatprep.mubr.f32.mxu0 0.0
      %2749 = vmatmul.mubr.f32.gmra.mxu0 %v1867
      %v2750 = vpop.f32.mrf.mxu0
      %v2751 = vadd.f32 %v2606, %v2750
      %v2752 = vpop.f32.mrf.mxu0
      %2753 = vmatprep.mubr.f32.mxu0 0.0
      %2754 = vmatmul.mubr.f32.gmra.mxu0 %v1870
      %v2755 = vpop.f32.mrf.mxu0
      %v2756 = vadd.f32 %v2611, %v2755
      %v2757 = vpop.f32.mrf.mxu0
      %2758 = vmatprep.mubr.f32.mxu0 0.0
      %2759 = vmatmul.mubr.f32.gmra.mxu0 %v1872
      %v2760 = vpop.f32.mrf.mxu0
      %v2761 = vadd.f32 %v2616, %v2760
      %v2762 = vpop.f32.mrf.mxu0
      %2763 = vmatprep.mubr.f32.mxu0 0.0
      %2764 = vmatmul.mubr.f32.gmra.mxu0 %v1875
      %v2765 = vpop.f32.mrf.mxu0
      %v2766 = vadd.f32 %v2621, %v2765
      %v2767 = vpop.f32.mrf.mxu0
      %2768 = vmatprep.mubr.f32.mxu0 0.0
      %2769 = vmatmul.mubr.f32.gmra.mxu0 %v1877
      %v2770 = vpop.f32.mrf.mxu0
      %v2771 = vadd.f32 %v2626, %v2770
      %v2772 = vpop.f32.mrf.mxu0
      %2773 = vdwg.mxu0
      %v2774 = vmax.f32 %v2696, 0.0
      %v2775 = vmax.f32 %v2701, 0.0
      %v2776 = vmax.f32 %v2706, 0.0
      %v2777 = vmax.f32 %v2711, 0.0
      %v2778 = vmax.f32 %v2716, 0.0
      %v2779 = vmax.f32 %v2721, 0.0
      %v2780 = vmax.f32 %v2726, 0.0
      %v2781 = vmax.f32 %v2731, 0.0
      %v2782 = vmax.f32 %v2736, 0.0
      %v2783 = vmax.f32 %v2741, 0.0
      %v2784 = vmax.f32 %v2746, 0.0
      %v2785 = vmax.f32 %v2751, 0.0
      %v2786 = vmax.f32 %v2756, 0.0
      %v2787 = vmax.f32 %v2761, 0.0
      %v2788 = vmax.f32 %v2766, 0.0
      %v2789 = vmax.f32 %v2771, 0.0
      %2790 = vst [vmem:[%s202] sm:$0xff] %v2774
      %2791 = vst [vmem:[%s202 + $0x8] sm:$0xff] %v2775
      %2792 = vst [vmem:[%s202 + $0x10] sm:$0xff] %v2776
      %2793 = vst [vmem:[%s202 + $0x18] sm:$0xff] %v2777
      %2794 = vst [vmem:[%s202 + $0x20] sm:$0xff] %v2778
      %2795 = vst [vmem:[%s202 + $0x28] sm:$0xff] %v2779
      %2796 = vst [vmem:[%s202 + $0x30] sm:$0xff] %v2780
      %2797 = vst [vmem:[%s202 + $0x38] sm:$0xff] %v2781
      %2798 = vst [vmem:[%s202 + $0x40] sm:$0xff] %v2782
      %2799 = vst [vmem:[%s202 + $0x48] sm:$0xff] %v2783
      %2800 = vst [vmem:[%s202 + $0x50] sm:$0xff] %v2784
      %2801 = vst [vmem:[%s202 + $0x58] sm:$0xff] %v2785
      %2802 = vst [vmem:[%s202 + $0x60] sm:$0xff] %v2786
      %2803 = vst [vmem:[%s202 + $0x68] sm:$0xff] %v2787
      %2804 = vst [vmem:[%s202 + $0x70] sm:$0xff] %v2788
      %2805 = vst [vmem:[%s202 + $0x78] sm:$0xff] %v2789
      %s2806 = smul.u32 8, %s21
      %p2807 = scmp.lt.s32.totalorder %s20, 1
      %s2808 = scalar_select %p2807, %s20, 1
      %p2809 = scmp.lt.s32.totalorder %s2806, 15
      %s2810 = scalar_select %p2809, %s2806, 15
      %s2811 = smul.addr %s2810, 2
      %s2812 = smul.addr %s2808, 32
      %s2813 = sadd.s32 %s2811, %s2812
      %s2814 = smul.addr %s2813, 8
      %s2815 = scalar_lea.vmem %s5, %s2814
      // Predicated region
      $region74: #{double_conv_forward.1} parent=35 // pred_check
        %p2816 = pneg %p132
      $region75: #{double_conv_forward.1} parent=35 // pred_check_branch
        %2818 = sbr.rel (%p2816) target = $region77
      $region76: #{double_conv_forward.1} parent=35 // pred_region
        %s2819 = smul.u32 8, %s21
      $region77: #{double_conv_forward.1} parent=35 // pred_fallthru
        _
    $region36: #{double_conv_forward.1} parent=5 // pred_fallthru
      _
    %p2820 = scmp.le.s32.totalorder 2, %s11
    // Predicated region
    $region78: #{double_conv_forward.1} parent=5 // pred_check
      %p2821 = pneg %p2820
    $region79: #{double_conv_forward.1} parent=5 // pred_check_branch
      %2823 = sbr.rel (%p2821) target = $region81
    $region80: #{double_conv_forward.1} parent=5 // pred_region
      %s2824 = ssub.s32 %s11, 2
      // Predicated region
      $region82: #{double_conv_forward.1} parent=80 // pred_check
        %p2825 = pneg %p138
      $region83: #{double_conv_forward.1} parent=80 // pred_check_branch
        %2827 = sbr.rel (%p2825) target = $region85
      $region84: #{double_conv_forward.1} parent=80 // pred_region
        %s2828 = smul.u32 8, %s23
        %p2829 = scmp.lt.s32.totalorder %s22, 1
        %s2830 = scalar_select %p2829, %s22, 1
        %p2831 = scmp.lt.s32.totalorder %s2828, 15
        %s2832 = scalar_select %p2831, %s2828, 15
        %s2833 = smul.addr %s2832, 2
        %s2834 = smul.addr %s2830, 32
        %s2835 = sadd.s32 %s2833, %s2834
        %s2836 = smul.addr %s2835, 8
        %s2837 = scalar_lea.vmem %s5, %s2836
      $region85: #{double_conv_forward.1} parent=80 // pred_fallthru
        _
    $region81: #{double_conv_forward.1} parent=5 // pred_fallthru
      _
  $region6: #{double_conv_forward.1} parent=0 // loop_footer
    %s15 = sadd.s32 1, %s11
  $region7: #{double_conv_forward.1} parent=0 // loop_footer_branch
    %10 = sbr.rel target = $region3
  $region8: #{double_conv_forward.1} parent=0 // loop_exit
    _
  %2838 = vsyncmov [#allocation4]
  %s2839 = vpop.sfrf %2838
  %p2840 = scmp.eq.s32.totalorder %s2839, 0
  %p2841 = pneg %p2840
  %2843 = shalt.err (%p2841)

</llo_original>
